<compile_context>
chip_gen: v7x
topology: tpu7x:2x2x1
jax: 0.10.0
libtpu: 0.0.40
codegen_flags: <defaults>
</compile_context>

<pallas_src>
from functools import partial

import jax
import jax.numpy as jnp
from jax.experimental import pallas as pl
from jax.experimental.pallas import tpu as pltpu


def _gelu_tanh(x):
    # TODO(synk): PyTorch nn.GELU() defaults to the exact erf form; the tanh
    # approximation is used here (guaranteed Mosaic lowering), max abs
    # deviation ~3e-3.
    c = 0.7978845608028654  # sqrt(2/pi)
    return 0.5 * x * (1.0 + jnp.tanh(c * (x + 0.044715 * (x * x * x))))


def _mlp_kernel(x_ref, w1_ref, b1_ref, dww_ref, dwb_ref, w2_ref, b2_ref,
                o_ref, pad_ref, *, H, W):
    hid = w1_ref.shape[1]
    N = H * W

    # ---- fc1: (N, Cin) @ (Cin, hid) + b1  (MXU, f32 accumulation) ----
    h = jnp.dot(x_ref[...], w1_ref[...], preferred_element_type=jnp.float32)
    h = h + b1_ref[...]                                   # (N, hid)

    # ---- depthwise 3x3 conv, padding=1, groups=hid ----
    # Write fc1 result into the interior of the halo buffer; zero only the
    # 1-wide border (the interior is fully overwritten every grid step).
    pad_ref[1:H + 1, 1:W + 1, :] = h.reshape(H, W, hid)
    zrow = jnp.zeros((1, W + 2, hid), jnp.float32)
    pad_ref[0:1, :, :] = zrow                             # top halo row
    pad_ref[H + 1:H + 2, :, :] = zrow                     # bottom halo row
    zcol = jnp.zeros((H, 1, hid), jnp.float32)
    pad_ref[1:H + 1, 0:1, :] = zcol                       # left halo column
    pad_ref[1:H + 1, W + 1:W + 2, :] = zcol               # right halo column

    # 9 shifted multiply-adds on the VPU.
    w_dw = dww_ref[...]                                   # (9, hid)
    acc = jnp.zeros((H, W, hid), jnp.float32)
    for ky in range(3):
        for kx in range(3):
            acc = acc + pad_ref[ky:ky + H, kx:kx + W, :] * w_dw[3 * ky + kx, :]
    a = acc.reshape(N, hid) + dwb_ref[...]                # (N, hid)

    # ---- GELU ----
    a = _gelu_tanh(a)

    # ---- Dropout(p=0.0) == identity ----
    # TODO(synk): training-mode Dropout with p > 0 is not implemented
    # in-kernel (module default drop=0.0).

    # ---- fc2: (N, hid) @ (hid, Cout) + b2 (MXU) ----
    out = jnp.dot(a, w2_ref[...], preferred_element_type=jnp.float32)
    out = out + b2_ref[...]
    o_ref[...] = out.astype(o_ref.dtype)


def mlp_pallas(x, w1, b1, dw_w, dw_b, w2, b2, H, W):
    """x: (B, H*W, Cin); w1: (Cin, hid); dw_w: (3, 3, hid); w2: (hid, Cout)."""
    B, N, Cin = x.shape
    hid = w1.shape[1]
    Cout = w2.shape[1]
    assert N == H * W

    # lane-dense packing of the small parameters
    dww = dw_w.reshape(9, hid)
    b1r = b1.reshape(1, hid)
    dwbr = dw_b.reshape(1, hid)
    b2r = b2.reshape(1, Cout)

    kernel = partial(_mlp_kernel, H=H, W=W)

    return pl.pallas_call(
        kernel,
        out_shape=jax.ShapeDtypeStruct((B, N, Cout), x.dtype),
        grid_spec=pltpu.PrefetchScalarGridSpec(
            num_scalar_prefetch=0,
            grid=(B,),
            in_specs=[
                pl.BlockSpec((None, N, Cin), lambda b: (b, 0, 0)),   # x (per-sample)
                pl.BlockSpec((Cin, hid), lambda b: (0, 0)),          # w1 (resident)
                pl.BlockSpec((1, hid), lambda b: (0, 0)),            # b1
                pl.BlockSpec((9, hid), lambda b: (0, 0)),            # dw weight
                pl.BlockSpec((1, hid), lambda b: (0, 0)),            # dw bias
                pl.BlockSpec((hid, Cout), lambda b: (0, 0)),         # w2
                pl.BlockSpec((1, Cout), lambda b: (0, 0)),           # b2
            ],
            out_specs=pl.BlockSpec((None, N, Cout), lambda b: (b, 0, 0)),
            scratch_shapes=[pltpu.VMEM((H + 2, W + 2, hid), jnp.float32)],
        ),
        compiler_params=pltpu.CompilerParams(
            dimension_semantics=("parallel",),
        ),
    )(x, w1, b1r, dww, dwbr, w2, b2r)


def mlp_reference(x, w1, b1, dw_w, dw_b, w2, b2, H, W):
    """Pure-JAX reference with identical semantics (drop=0.0, tanh GELU)."""
    B, N, Cin = x.shape
    hid = w1.shape[1]
    h = jnp.dot(x, w1) + b1                              # (B, N, hid)
    h4 = h.reshape(B, H, W, hid)
    conv = jax.lax.conv_general_dilated(
        h4, dw_w.reshape(3, 3, 1, hid),
        window_strides=(1, 1), padding=((1, 1), (1, 1)),
        dimension_numbers=("NHWC", "HWIO", "NHWC"),
        feature_group_count=hid,
    ) + dw_b
    a = _gelu_tanh(conv.reshape(B, N, hid))
    return jnp.dot(a, w2) + b2


if __name__ == "__main__":
    key = jax.random.PRNGKey(0)
    B, H, W = 2, 16, 16
    Cin, hid, Cout = 32, 128, 32           # out_features defaults to in_features
    N = H * W

    ks = jax.random.split(key, 7)
    x = jax.random.normal(ks[0], (B, N, Cin), dtype=jnp.float32)
    w1 = jax.random.normal(ks[1], (Cin, hid), dtype=jnp.float32) * 0.2
    b1 = jax.random.normal(ks[2], (hid,), dtype=jnp.float32) * 0.1
    dw_w = jax.random.normal(ks[3], (3, 3, hid), dtype=jnp.float32) * 0.2
    dw_b = jax.random.normal(ks[4], (hid,), dtype=jnp.float32) * 0.1
    w2 = jax.random.normal(ks[5], (hid, Cout), dtype=jnp.float32) * 0.2
    b2 = jax.random.normal(ks[6], (Cout,), dtype=jnp.float32) * 0.1

    y = mlp_pallas(x, w1, b1, dw_w, dw_b, w2, b2, H, W)
    y = jax.block_until_ready(y)
    assert y.shape == (B, N, Cout) and y.dtype == x.dtype

    y_ref = mlp_reference(x, w1, b1, dw_w, dw_b, w2, b2, H, W)
    max_err = float(jnp.max(jnp.abs(y - y_ref)))
    assert jnp.allclose(y, y_ref, atol=2e-2, rtol=2e-2), f"max abs err {max_err}"

    print("KERNEL_OK")
</pallas_src>

<mosaic_0001>
module attributes {stable_mosaic.version = 11 : i64} {
  func.func @_mlp_kernel(%arg0: i32, %arg1: memref<1x256x32xf32, #tpu.memory_space<vmem>>, %arg2: memref<32x128xf32, #tpu.memory_space<vmem>>, %arg3: memref<1x128xf32, #tpu.memory_space<vmem>>, %arg4: memref<9x128xf32, #tpu.memory_space<vmem>>, %arg5: memref<1x128xf32, #tpu.memory_space<vmem>>, %arg6: memref<128x32xf32, #tpu.memory_space<vmem>>, %arg7: memref<1x32xf32, #tpu.memory_space<vmem>>, %arg8: memref<1x256x32xf32, #tpu.memory_space<vmem>>, %arg9: memref<18x18x128xf32, #tpu.memory_space<vmem>>) attributes {dimension_semantics = [#tpu.dimension_semantics<parallel>], iteration_bounds = array<i64: 2>, scalar_prefetch = 0 : i64, scratch_operands = 1 : i64, tpu.core_type = #tpu.core_type<tc>, window_params = [{transform_indices = @transform_0, window_bounds = array<i64: 1, 256, 32>}, {pipeline_mode = #tpu.pipeline_mode<synchronous>, transform_indices = @transform_1, window_bounds = array<i64: 32, 128>}, {pipeline_mode = #tpu.pipeline_mode<synchronous>, transform_indices = @transform_2, window_bounds = array<i64: 1, 128>}, {pipeline_mode = #tpu.pipeline_mode<synchronous>, transform_indices = @transform_3, window_bounds = array<i64: 9, 128>}, {pipeline_mode = #tpu.pipeline_mode<synchronous>, transform_indices = @transform_4, window_bounds = array<i64: 1, 128>}, {pipeline_mode = #tpu.pipeline_mode<synchronous>, transform_indices = @transform_5, window_bounds = array<i64: 128, 32>}, {pipeline_mode = #tpu.pipeline_mode<synchronous>, transform_indices = @transform_6, window_bounds = array<i64: 1, 32>}, {transform_indices = @transform_7, window_bounds = array<i64: 1, 256, 32>}]} {
    %c0 = arith.constant 0 : index
    %c0_0 = arith.constant 0 : index
    %c0_1 = arith.constant 0 : index
    %0 = vector.load %arg1[%c0, %c0_0, %c0_1] : memref<1x256x32xf32, #tpu.memory_space<vmem>>, vector<1x256x32xf32>
    %1 = vector.shape_cast %0 : vector<1x256x32xf32> to vector<256x32xf32>
    %c0_2 = arith.constant 0 : index
    %c0_3 = arith.constant 0 : index
    %2 = vector.load %arg2[%c0_2, %c0_3] : memref<32x128xf32, #tpu.memory_space<vmem>>, vector<32x128xf32>
    %cst = arith.constant dense<0.000000e+00> : vector<256x128xf32>
    %3 = tpu.matmul %1, %2, %cst {dimension_numbers = #tpu.dot_dimension_numbers<[1], [0], [0], [1], [0, 0, 1, 1], [], []>} : vector<256x32xf32>, vector<32x128xf32>, vector<256x128xf32> -> vector<256x128xf32>
    %c0_4 = arith.constant 0 : index
    %c0_5 = arith.constant 0 : index
    %4 = vector.load %arg3[%c0_4, %c0_5] : memref<1x128xf32, #tpu.memory_space<vmem>>, vector<1x128xf32>
    %5 = vector.broadcast %4 : vector<1x128xf32> to vector<256x128xf32>
    %6 = arith.addf %3, %5 : vector<256x128xf32>
    %7 = vector.shape_cast %6 : vector<256x128xf32> to vector<16x16x128xf32>
    %c1 = arith.constant 1 : index
    %c1_6 = arith.constant 1 : index
    %c0_7 = arith.constant 0 : index
    %8 = vector.load %arg9[%c1, %c1_6, %c0_7] : memref<18x18x128xf32, #tpu.memory_space<vmem>>, vector<16x16x128xf32>
    tpu.vector_store %arg9[%c1, %c1_6, %c0_7], %7 {strides = array<i32>} : memref<18x18x128xf32, #tpu.memory_space<vmem>>, vector<16x16x128xf32>,
    %cst_8 = arith.constant 0.000000e+00 : f32
    %9 = vector.broadcast %cst_8 : f32 to vector<1x18x128xf32>
    %c0_9 = arith.constant 0 : index
    %c0_10 = arith.constant 0 : index
    %c0_11 = arith.constant 0 : index
    %10 = vector.load %arg9[%c0_9, %c0_10, %c0_11] : memref<18x18x128xf32, #tpu.memory_space<vmem>>, vector<1x18x128xf32>
    tpu.vector_store %arg9[%c0_9, %c0_10, %c0_11], %9 {strides = array<i32>} : memref<18x18x128xf32, #tpu.memory_space<vmem>>, vector<1x18x128xf32>,
    %c17 = arith.constant 17 : index
    %c0_12 = arith.constant 0 : index
    %c0_13 = arith.constant 0 : index
    %11 = vector.load %arg9[%c17, %c0_12, %c0_13] : memref<18x18x128xf32, #tpu.memory_space<vmem>>, vector<1x18x128xf32>
    tpu.vector_store %arg9[%c17, %c0_12, %c0_13], %9 {strides = array<i32>} : memref<18x18x128xf32, #tpu.memory_space<vmem>>, vector<1x18x128xf32>,
    %cst_14 = arith.constant 0.000000e+00 : f32
    %12 = vector.broadcast %cst_14 : f32 to vector<16x1x128xf32>
    %c1_15 = arith.constant 1 : index
    %c0_16 = arith.constant 0 : index
    %c0_17 = arith.constant 0 : index
    %13 = vector.load %arg9[%c1_15, %c0_16, %c0_17] : memref<18x18x128xf32, #tpu.memory_space<vmem>>, vector<16x1x128xf32>
    tpu.vector_store %arg9[%c1_15, %c0_16, %c0_17], %12 {strides = array<i32>} : memref<18x18x128xf32, #tpu.memory_space<vmem>>, vector<16x1x128xf32>,
    %c1_18 = arith.constant 1 : index
    %c17_19 = arith.constant 17 : index
    %c0_20 = arith.constant 0 : index
    %14 = vector.load %arg9[%c1_18, %c17_19, %c0_20] : memref<18x18x128xf32, #tpu.memory_space<vmem>>, vector<16x1x128xf32>
    tpu.vector_store %arg9[%c1_18, %c17_19, %c0_20], %12 {strides = array<i32>} : memref<18x18x128xf32, #tpu.memory_space<vmem>>, vector<16x1x128xf32>,
    %c0_21 = arith.constant 0 : index
    %c0_22 = arith.constant 0 : index
    %15 = vector.load %arg4[%c0_21, %c0_22] : memref<9x128xf32, #tpu.memory_space<vmem>>, vector<9x128xf32>
    %cst_23 = arith.constant 0.000000e+00 : f32
    %16 = vector.broadcast %cst_23 : f32 to vector<16x16x128xf32>
    %c0_24 = arith.constant 0 : index
    %c0_25 = arith.constant 0 : index
    %c0_26 = arith.constant 0 : index
    %17 = vector.load %arg9[%c0_24, %c0_25, %c0_26] : memref<18x18x128xf32, #tpu.memory_space<vmem>>, vector<16x16x128xf32>
    %18 = vector.extract_strided_slice %15 {offsets = [0, 0], sizes = [1, 128], strides = [1, 1]} : vector<9x128xf32> to vector<1x128xf32>
    %19 = vector.shape_cast %18 : vector<1x128xf32> to vector<128xf32>
    %20 = vector.shape_cast %19 : vector<128xf32> to vector<1x1x128xf32>
    %21 = vector.broadcast %20 : vector<1x1x128xf32> to vector<16x16x128xf32>
    %22 = arith.mulf %17, %21 : vector<16x16x128xf32>
    %23 = arith.addf %16, %22 : vector<16x16x128xf32>
    %c0_27 = arith.constant 0 : index
    %c1_28 = arith.constant 1 : index
    %c0_29 = arith.constant 0 : index
    %24 = vector.load %arg9[%c0_27, %c1_28, %c0_29] : memref<18x18x128xf32, #tpu.memory_space<vmem>>, vector<16x16x128xf32>
    %25 = vector.extract_strided_slice %15 {offsets = [1, 0], sizes = [1, 128], strides = [1, 1]} : vector<9x128xf32> to vector<1x128xf32>
    %26 = vector.shape_cast %25 : vector<1x128xf32> to vector<128xf32>
    %27 = vector.shape_cast %26 : vector<128xf32> to vector<1x1x128xf32>
    %28 = vector.broadcast %27 : vector<1x1x128xf32> to vector<16x16x128xf32>
    %29 = arith.mulf %24, %28 : vector<16x16x128xf32>
    %30 = arith.addf %23, %29 : vector<16x16x128xf32>
    %c0_30 = arith.constant 0 : index
    %c2 = arith.constant 2 : index
    %c0_31 = arith.constant 0 : index
    %31 = vector.load %arg9[%c0_30, %c2, %c0_31] : memref<18x18x128xf32, #tpu.memory_space<vmem>>, vector<16x16x128xf32>
    %32 = vector.extract_strided_slice %15 {offsets = [2, 0], sizes = [1, 128], strides = [1, 1]} : vector<9x128xf32> to vector<1x128xf32>
    %33 = vector.shape_cast %32 : vector<1x128xf32> to vector<128xf32>
    %34 = vector.shape_cast %33 : vector<128xf32> to vector<1x1x128xf32>
    %35 = vector.broadcast %34 : vector<1x1x128xf32> to vector<16x16x128xf32>
    %36 = arith.mulf %31, %35 : vector<16x16x128xf32>
    %37 = arith.addf %30, %36 : vector<16x16x128xf32>
    %c1_32 = arith.constant 1 : index
    %c0_33 = arith.constant 0 : index
    %c0_34 = arith.constant 0 : index
    %38 = vector.load %arg9[%c1_32, %c0_33, %c0_34] : memref<18x18x128xf32, #tpu.memory_space<vmem>>, vector<16x16x128xf32>
    %39 = vector.extract_strided_slice %15 {offsets = [3, 0], sizes = [1, 128], strides = [1, 1]} : vector<9x128xf32> to vector<1x128xf32>
    %40 = vector.shape_cast %39 : vector<1x128xf32> to vector<128xf32>
    %41 = vector.shape_cast %40 : vector<128xf32> to vector<1x1x128xf32>
    %42 = vector.broadcast %41 : vector<1x1x128xf32> to vector<16x16x128xf32>
    %43 = arith.mulf %38, %42 : vector<16x16x128xf32>
    %44 = arith.addf %37, %43 : vector<16x16x128xf32>
    %c1_35 = arith.constant 1 : index
    %c1_36 = arith.constant 1 : index
    %c0_37 = arith.constant 0 : index
    %45 = vector.load %arg9[%c1_35, %c1_36, %c0_37] : memref<18x18x128xf32, #tpu.memory_space<vmem>>, vector<16x16x128xf32>
    %46 = vector.extract_strided_slice %15 {offsets = [4, 0], sizes = [1, 128], strides = [1, 1]} : vector<9x128xf32> to vector<1x128xf32>
    %47 = vector.shape_cast %46 : vector<1x128xf32> to vector<128xf32>
    %48 = vector.shape_cast %47 : vector<128xf32> to vector<1x1x128xf32>
    %49 = vector.broadcast %48 : vector<1x1x128xf32> to vector<16x16x128xf32>
    %50 = arith.mulf %45, %49 : vector<16x16x128xf32>
    %51 = arith.addf %44, %50 : vector<16x16x128xf32>
    %c1_38 = arith.constant 1 : index
    %c2_39 = arith.constant 2 : index
    %c0_40 = arith.constant 0 : index
    %52 = vector.load %arg9[%c1_38, %c2_39, %c0_40] : memref<18x18x128xf32, #tpu.memory_space<vmem>>, vector<16x16x128xf32>
    %53 = vector.extract_strided_slice %15 {offsets = [5, 0], sizes = [1, 128], strides = [1, 1]} : vector<9x128xf32> to vector<1x128xf32>
    %54 = vector.shape_cast %53 : vector<1x128xf32> to vector<128xf32>
    %55 = vector.shape_cast %54 : vector<128xf32> to vector<1x1x128xf32>
    %56 = vector.broadcast %55 : vector<1x1x128xf32> to vector<16x16x128xf32>
    %57 = arith.mulf %52, %56 : vector<16x16x128xf32>
    %58 = arith.addf %51, %57 : vector<16x16x128xf32>
    %c2_41 = arith.constant 2 : index
    %c0_42 = arith.constant 0 : index
    %c0_43 = arith.constant 0 : index
    %59 = vector.load %arg9[%c2_41, %c0_42, %c0_43] : memref<18x18x128xf32, #tpu.memory_space<vmem>>, vector<16x16x128xf32>
    %60 = vector.extract_strided_slice %15 {offsets = [6, 0], sizes = [1, 128], strides = [1, 1]} : vector<9x128xf32> to vector<1x128xf32>
    %61 = vector.shape_cast %60 : vector<1x128xf32> to vector<128xf32>
    %62 = vector.shape_cast %61 : vector<128xf32> to vector<1x1x128xf32>
    %63 = vector.broadcast %62 : vector<1x1x128xf32> to vector<16x16x128xf32>
    %64 = arith.mulf %59, %63 : vector<16x16x128xf32>
    %65 = arith.addf %58, %64 : vector<16x16x128xf32>
    %c2_44 = arith.constant 2 : index
    %c1_45 = arith.constant 1 : index
    %c0_46 = arith.constant 0 : index
    %66 = vector.load %arg9[%c2_44, %c1_45, %c0_46] : memref<18x18x128xf32, #tpu.memory_space<vmem>>, vector<16x16x128xf32>
    %67 = vector.extract_strided_slice %15 {offsets = [7, 0], sizes = [1, 128], strides = [1, 1]} : vector<9x128xf32> to vector<1x128xf32>
    %68 = vector.shape_cast %67 : vector<1x128xf32> to vector<128xf32>
    %69 = vector.shape_cast %68 : vector<128xf32> to vector<1x1x128xf32>
    %70 = vector.broadcast %69 : vector<1x1x128xf32> to vector<16x16x128xf32>
    %71 = arith.mulf %66, %70 : vector<16x16x128xf32>
    %72 = arith.addf %65, %71 : vector<16x16x128xf32>
    %c2_47 = arith.constant 2 : index
    %c2_48 = arith.constant 2 : index
    %c0_49 = arith.constant 0 : index
    %73 = vector.load %arg9[%c2_47, %c2_48, %c0_49] : memref<18x18x128xf32, #tpu.memory_space<vmem>>, vector<16x16x128xf32>
    %74 = vector.extract_strided_slice %15 {offsets = [8, 0], sizes = [1, 128], strides = [1, 1]} : vector<9x128xf32> to vector<1x128xf32>
    %75 = vector.shape_cast %74 : vector<1x128xf32> to vector<128xf32>
    %76 = vector.shape_cast %75 : vector<128xf32> to vector<1x1x128xf32>
    %77 = vector.broadcast %76 : vector<1x1x128xf32> to vector<16x16x128xf32>
    %78 = arith.mulf %73, %77 : vector<16x16x128xf32>
    %79 = arith.addf %72, %78 : vector<16x16x128xf32>
    %80 = vector.shape_cast %79 : vector<16x16x128xf32> to vector<256x128xf32>
    %c0_50 = arith.constant 0 : index
    %c0_51 = arith.constant 0 : index
    %81 = vector.load %arg5[%c0_50, %c0_51] : memref<1x128xf32, #tpu.memory_space<vmem>>, vector<1x128xf32>
    %82 = vector.broadcast %81 : vector<1x128xf32> to vector<256x128xf32>
    %83 = arith.addf %80, %82 : vector<256x128xf32>
    %cst_52 = arith.constant 5.000000e-01 : f32
    %84 = vector.broadcast %cst_52 : f32 to vector<256x128xf32>
    %85 = arith.mulf %84, %83 : vector<256x128xf32>
    %86 = arith.mulf %83, %83 : vector<256x128xf32>
    %87 = arith.mulf %86, %83 : vector<256x128xf32>
    %cst_53 = arith.constant 4.471500e-02 : f32
    %88 = vector.broadcast %cst_53 : f32 to vector<256x128xf32>
    %89 = arith.mulf %88, %87 : vector<256x128xf32>
    %90 = arith.addf %83, %89 : vector<256x128xf32>
    %cst_54 = arith.constant 0.797884583 : f32
    %91 = vector.broadcast %cst_54 : f32 to vector<256x128xf32>
    %92 = arith.mulf %91, %90 : vector<256x128xf32>
    %93 = math.tanh %92 : vector<256x128xf32>
    %cst_55 = arith.constant 1.000000e+00 : f32
    %94 = vector.broadcast %cst_55 : f32 to vector<256x128xf32>
    %95 = arith.addf %94, %93 : vector<256x128xf32>
    %96 = arith.mulf %85, %95 : vector<256x128xf32>
    %c0_56 = arith.constant 0 : index
    %c0_57 = arith.constant 0 : index
    %97 = vector.load %arg6[%c0_56, %c0_57] : memref<128x32xf32, #tpu.memory_space<vmem>>, vector<128x32xf32>
    %cst_58 = arith.constant dense<0.000000e+00> : vector<256x32xf32>
    %98 = tpu.matmul %96, %97, %cst_58 {dimension_numbers = #tpu.dot_dimension_numbers<[1], [0], [0], [1], [0, 0, 1, 1], [], []>} : vector<256x128xf32>, vector<128x32xf32>, vector<256x32xf32> -> vector<256x32xf32>
    %c0_59 = arith.constant 0 : index
    %c0_60 = arith.constant 0 : index
    %99 = vector.load %arg7[%c0_59, %c0_60] : memref<1x32xf32, #tpu.memory_space<vmem>>, vector<1x32xf32>
    %100 = vector.broadcast %99 : vector<1x32xf32> to vector<256x32xf32>
    %101 = arith.addf %98, %100 : vector<256x32xf32>
    %c0_61 = arith.constant 0 : index
    %c0_62 = arith.constant 0 : index
    %c0_63 = arith.constant 0 : index
    %102 = vector.load %arg8[%c0_61, %c0_62, %c0_63] : memref<1x256x32xf32, #tpu.memory_space<vmem>>, vector<1x256x32xf32>
    %103 = vector.shape_cast %102 : vector<1x256x32xf32> to vector<256x32xf32>
    %104 = vector.shape_cast %101 : vector<256x32xf32> to vector<1x256x32xf32>
    tpu.vector_store %arg8[%c0_61, %c0_62, %c0_63], %104 {strides = array<i32>} : memref<1x256x32xf32, #tpu.memory_space<vmem>>, vector<1x256x32xf32>,
    return
  }
  func.func @transform_0(%arg0: i32) -> (i32, i32, i32) {
    %c0_i32 = arith.constant 0 : i32
    %c0_i32_0 = arith.constant 0 : i32
    %c0_i32_1 = arith.constant 0 : i32
    return %arg0, %c0_i32, %c0_i32_0 : i32, i32, i32
  }
  func.func @transform_1(%arg0: i32) -> (i32, i32) {
    %c0_i32 = arith.constant 0 : i32
    %c0_i32_0 = arith.constant 0 : i32
    %c0_i32_1 = arith.constant 0 : i32
    return %c0_i32, %c0_i32_0 : i32, i32
  }
  func.func @transform_2(%arg0: i32) -> (i32, i32) {
    %c0_i32 = arith.constant 0 : i32
    %c0_i32_0 = arith.constant 0 : i32
    %c0_i32_1 = arith.constant 0 : i32
    return %c0_i32, %c0_i32_0 : i32, i32
  }
  func.func @transform_3(%arg0: i32) -> (i32, i32) {
    %c0_i32 = arith.constant 0 : i32
    %c0_i32_0 = arith.constant 0 : i32
    %c0_i32_1 = arith.constant 0 : i32
    return %c0_i32, %c0_i32_0 : i32, i32
  }
  func.func @transform_4(%arg0: i32) -> (i32, i32) {
    %c0_i32 = arith.constant 0 : i32
    %c0_i32_0 = arith.constant 0 : i32
    %c0_i32_1 = arith.constant 0 : i32
    return %c0_i32, %c0_i32_0 : i32, i32
  }
  func.func @transform_5(%arg0: i32) -> (i32, i32) {
    %c0_i32 = arith.constant 0 : i32
    %c0_i32_0 = arith.constant 0 : i32
    %c0_i32_1 = arith.constant 0 : i32
    return %c0_i32, %c0_i32_0 : i32, i32
  }
  func.func @transform_6(%arg0: i32) -> (i32, i32) {
    %c0_i32 = arith.constant 0 : i32
    %c0_i32_0 = arith.constant 0 : i32
    %c0_i32_1 = arith.constant 0 : i32
    return %c0_i32, %c0_i32_0 : i32, i32
  }
  func.func @transform_7(%arg0: i32) -> (i32, i32, i32) {
    %c0_i32 = arith.constant 0 : i32
    %c0_i32_0 = arith.constant 0 : i32
    %c0_i32_1 = arith.constant 0 : i32
    return %arg0, %c0_i32, %c0_i32_0 : i32, i32, i32
  }
}

</mosaic_0001>

<llo_original>
// kernel: tpu_custom_call.1
$region0: #{tpu_custom_call.1}
  #allocation0 [shape = 'u32[]', space=smem, size = 0x4, offset = 0x4, fixed_abs, tag = 'smem constant byte address 0x4 - core index']
  #allocation1 [shape = 'u32[144,128]{1,0:T(1,128)}', space=vmem, size = 0x12000, scoped, tag = 'internal scratch']
  #allocation2 [shape = 'f32[18,18,128]{2,1,0:T(8,128)}', space=vmem, size = 0x36000, scoped, tag = 'scratch operand']
  %s0 = inlined_call_operand.vmem [shape: f32[2,256,32], index: 0, kind: input, shape index: {}]
  %s1 = inlined_call_operand.vmem [shape: f32[32,128], index: 1, kind: input, shape index: {}]
  %s2 = inlined_call_operand.vmem [shape: f32[1,128], index: 2, kind: input, shape index: {}]
  %s3 = inlined_call_operand.vmem [shape: f32[9,128], index: 3, kind: input, shape index: {}]
  %s4 = inlined_call_operand.vmem [shape: f32[1,128], index: 4, kind: input, shape index: {}]
  %s5 = inlined_call_operand.vmem [shape: f32[128,32], index: 5, kind: input, shape index: {}]
  %s6 = inlined_call_operand.vmem [shape: f32[1,32], index: 6, kind: input, shape index: {}]
  %s7 = inlined_call_operand.vmem [shape: f32[2,256,32], index: 7, kind: output, shape index: {}]
  %s8 = sld [smem:[#allocation0]]
  $region61: #{tpu_custom_call.1} parent=0
    _
  %s10 = ssub.s32 1, %s8
  %s11 = scalar_select 0, %s10, %s8
  loop: start=0, step=1, limit=4
  $region2: #{tpu_custom_call.1} parent=0 // loop_pre_header
    _
  $region3: #{tpu_custom_call.1} parent=0 // loop_header
    %s13 = sphi 0, %s17
    %p14 = scmp.ge.s32.totalorder %s13, 4
    %s23 = sphi 0, %s25
    %s26 = sphi 0, %s23
    %s27 = sphi 0, %s26
    %s43 = sphi 0, %s27
    %s47 = sphi 0, %s47
    %s49 = sphi 0, %s47
    %s50 = sphi 0, %s49
    %s64 = sphi 0, %s50
    %s68 = sphi 0, %s68
    %s70 = sphi 0, %s68
    %s71 = sphi 0, %s70
    %s85 = sphi 0, %s71
    %s89 = sphi 0, %s89
    %s91 = sphi 0, %s89
    %s92 = sphi 0, %s91
    %s106 = sphi 0, %s92
    %s110 = sphi 0, %s110
    %s112 = sphi 0, %s110
    %s113 = sphi 0, %s112
    %s127 = sphi 0, %s113
    %s131 = sphi 0, %s131
    %s133 = sphi 0, %s131
    %s134 = sphi 0, %s133
    %s148 = sphi 0, %s134
    %s152 = sphi 0, %s152
    %s154 = sphi 0, %s152
    %s155 = sphi 0, %s154
    %s169 = sphi 0, %s155
    %s175 = sphi 0, %s177
    %s178 = sphi 0, %s175
    %s179 = sphi 0, %s178
    %s195 = sphi 0, %s179
  $region4: #{tpu_custom_call.1} parent=0 // loop_header_branch
    %16 = sbr.rel (%p14) target = $region8
  $region5: #{tpu_custom_call.1} parent=0 // loop_body
    %s18 = ssub.s32 %s13, 1
    %s19 = ssub.s32 %s13, 2
    %s20 = sadd.s32 %s13, 1
    %s21 = ssub.s32 %s13, %s20
    %p22 = scmp.eq.s32.totalorder %s21, 0
    %s24 = sadd.s32 %s23, 1
    %s25 = scalar_select %p22, %s23, %s24
    %p28 = pneg %p22
    %p29 = scmp.eq.s32.totalorder %s13, 1
    %p30 = por %p28, %p29
    %p31 = scmp.ne.s32.totalorder %s23, %s26
    %p32 = scmp.eq.s32.totalorder %s13, 0
    %p33 = por %p31, %p32
    %p34 = scmp.ne.s32.totalorder %s23, %s26
    %p35 = scmp.eq.s32.totalorder %s18, 1
    %p36 = por %p34, %p35
    %p37 = scmp.ne.s32.totalorder %s26, %s27
    %p38 = scmp.eq.s32.totalorder %s18, 0
    %p39 = por %p37, %p38
    %p40 = scmp.ne.s32.totalorder %s26, %s27
    %p41 = scmp.eq.s32.totalorder %s19, 1
    %p42 = por %p40, %p41
    %p44 = scmp.ne.s32.totalorder %s27, %s43
    %p45 = scmp.eq.s32.totalorder %s19, 0
    %p46 = por %p44, %p45
    %s48 = sadd.s32 %s47, 1
    %p51 = scmp.eq.s32.totalorder %s13, 1
    %p52 = scmp.ne.s32.totalorder %s47, %s49
    %p53 = scmp.eq.s32.totalorder %s13, 0
    %p54 = por %p52, %p53
    %p55 = scmp.ne.s32.totalorder %s47, %s49
    %p56 = scmp.eq.s32.totalorder %s18, 1
    %p57 = por %p55, %p56
    %p58 = scmp.ne.s32.totalorder %s49, %s50
    %p59 = scmp.eq.s32.totalorder %s18, 0
    %p60 = por %p58, %p59
    %p61 = scmp.ne.s32.totalorder %s49, %s50
    %p62 = scmp.eq.s32.totalorder %s19, 1
    %p63 = por %p61, %p62
    %p65 = scmp.ne.s32.totalorder %s50, %s64
    %p66 = scmp.eq.s32.totalorder %s19, 0
    %p67 = por %p65, %p66
    %s69 = sadd.s32 %s68, 1
    %p72 = scmp.eq.s32.totalorder %s13, 1
    %p73 = scmp.ne.s32.totalorder %s68, %s70
    %p74 = scmp.eq.s32.totalorder %s13, 0
    %p75 = por %p73, %p74
    %p76 = scmp.ne.s32.totalorder %s68, %s70
    %p77 = scmp.eq.s32.totalorder %s18, 1
    %p78 = por %p76, %p77
    %p79 = scmp.ne.s32.totalorder %s70, %s71
    %p80 = scmp.eq.s32.totalorder %s18, 0
    %p81 = por %p79, %p80
    %p82 = scmp.ne.s32.totalorder %s70, %s71
    %p83 = scmp.eq.s32.totalorder %s19, 1
    %p84 = por %p82, %p83
    %p86 = scmp.ne.s32.totalorder %s71, %s85
    %p87 = scmp.eq.s32.totalorder %s19, 0
    %p88 = por %p86, %p87
    %s90 = sadd.s32 %s89, 1
    %p93 = scmp.eq.s32.totalorder %s13, 1
    %p94 = scmp.ne.s32.totalorder %s89, %s91
    %p95 = scmp.eq.s32.totalorder %s13, 0
    %p96 = por %p94, %p95
    %p97 = scmp.ne.s32.totalorder %s89, %s91
    %p98 = scmp.eq.s32.totalorder %s18, 1
    %p99 = por %p97, %p98
    %p100 = scmp.ne.s32.totalorder %s91, %s92
    %p101 = scmp.eq.s32.totalorder %s18, 0
    %p102 = por %p100, %p101
    %p103 = scmp.ne.s32.totalorder %s91, %s92
    %p104 = scmp.eq.s32.totalorder %s19, 1
    %p105 = por %p103, %p104
    %p107 = scmp.ne.s32.totalorder %s92, %s106
    %p108 = scmp.eq.s32.totalorder %s19, 0
    %p109 = por %p107, %p108
    %s111 = sadd.s32 %s110, 1
    %p114 = scmp.eq.s32.totalorder %s13, 1
    %p115 = scmp.ne.s32.totalorder %s110, %s112
    %p116 = scmp.eq.s32.totalorder %s13, 0
    %p117 = por %p115, %p116
    %p118 = scmp.ne.s32.totalorder %s110, %s112
    %p119 = scmp.eq.s32.totalorder %s18, 1
    %p120 = por %p118, %p119
    %p121 = scmp.ne.s32.totalorder %s112, %s113
    %p122 = scmp.eq.s32.totalorder %s18, 0
    %p123 = por %p121, %p122
    %p124 = scmp.ne.s32.totalorder %s112, %s113
    %p125 = scmp.eq.s32.totalorder %s19, 1
    %p126 = por %p124, %p125
    %p128 = scmp.ne.s32.totalorder %s113, %s127
    %p129 = scmp.eq.s32.totalorder %s19, 0
    %p130 = por %p128, %p129
    %s132 = sadd.s32 %s131, 1
    %p135 = scmp.eq.s32.totalorder %s13, 1
    %p136 = scmp.ne.s32.totalorder %s131, %s133
    %p137 = scmp.eq.s32.totalorder %s13, 0
    %p138 = por %p136, %p137
    %p139 = scmp.ne.s32.totalorder %s131, %s133
    %p140 = scmp.eq.s32.totalorder %s18, 1
    %p141 = por %p139, %p140
    %p142 = scmp.ne.s32.totalorder %s133, %s134
    %p143 = scmp.eq.s32.totalorder %s18, 0
    %p144 = por %p142, %p143
    %p145 = scmp.ne.s32.totalorder %s133, %s134
    %p146 = scmp.eq.s32.totalorder %s19, 1
    %p147 = por %p145, %p146
    %p149 = scmp.ne.s32.totalorder %s134, %s148
    %p150 = scmp.eq.s32.totalorder %s19, 0
    %p151 = por %p149, %p150
    %s153 = sadd.s32 %s152, 1
    %p156 = scmp.eq.s32.totalorder %s13, 1
    %p157 = scmp.ne.s32.totalorder %s152, %s154
    %p158 = scmp.eq.s32.totalorder %s13, 0
    %p159 = por %p157, %p158
    %p160 = scmp.ne.s32.totalorder %s152, %s154
    %p161 = scmp.eq.s32.totalorder %s18, 1
    %p162 = por %p160, %p161
    %p163 = scmp.ne.s32.totalorder %s154, %s155
    %p164 = scmp.eq.s32.totalorder %s18, 0
    %p165 = por %p163, %p164
    %p166 = scmp.ne.s32.totalorder %s154, %s155
    %p167 = scmp.eq.s32.totalorder %s19, 1
    %p168 = por %p166, %p167
    %p170 = scmp.ne.s32.totalorder %s155, %s169
    %p171 = scmp.eq.s32.totalorder %s19, 0
    %p172 = por %p170, %p171
    %s173 = ssub.s32 %s13, %s20
    %p174 = scmp.eq.s32.totalorder %s173, 0
    %s176 = sadd.s32 %s175, 1
    %s177 = scalar_select %p174, %s175, %s176
    %p180 = pneg %p174
    %p181 = scmp.eq.s32.totalorder %s13, 1
    %p182 = por %p180, %p181
    %p183 = scmp.ne.s32.totalorder %s175, %s178
    %p184 = scmp.eq.s32.totalorder %s13, 0
    %p185 = por %p183, %p184
    %p186 = scmp.ne.s32.totalorder %s175, %s178
    %p187 = scmp.eq.s32.totalorder %s18, 1
    %p188 = por %p186, %p187
    %p189 = scmp.ne.s32.totalorder %s178, %s179
    %p190 = scmp.eq.s32.totalorder %s18, 0
    %p191 = por %p189, %p190
    %p192 = scmp.ne.s32.totalorder %s178, %s179
    %p193 = scmp.eq.s32.totalorder %s19, 1
    %p194 = por %p192, %p193
    %p196 = scmp.ne.s32.totalorder %s179, %s195
    %p197 = scmp.eq.s32.totalorder %s19, 0
    %p198 = por %p196, %p197
    %p199 = scmp.le.s32.totalorder 1, %s13
    %p200 = scmp.lt.s32.totalorder %s13, 3
    %p201 = pnand %p199, %p200
    %p202 = pneg %p201
    // Predicated region
    $region9: #{tpu_custom_call.1} parent=5 // pred_check
      _
    $region10: #{tpu_custom_call.1} parent=5 // pred_check_branch
      %204 = sbr.rel (%p201) target = $region12
    $region11: #{tpu_custom_call.1} parent=5 // pred_region
      %s205 = ssub.s32 %s13, 1
      // Predicated region
      $region13: #{tpu_custom_call.1} parent=11 // pred_check
        %p206 = pneg %p60
      $region14: #{tpu_custom_call.1} parent=11 // pred_check_branch
        %208 = sbr.rel (%p206) target = $region16
      $region15: #{tpu_custom_call.1} parent=11 // pred_region
        _
      $region16: #{tpu_custom_call.1} parent=11 // pred_fallthru
        _
      // Predicated region
      $region17: #{tpu_custom_call.1} parent=11 // pred_check
        %p209 = pneg %p81
      $region18: #{tpu_custom_call.1} parent=11 // pred_check_branch
        %211 = sbr.rel (%p209) target = $region20
      $region19: #{tpu_custom_call.1} parent=11 // pred_region
        _
      $region20: #{tpu_custom_call.1} parent=11 // pred_fallthru
        _
      // Predicated region
      $region21: #{tpu_custom_call.1} parent=11 // pred_check
        %p212 = pneg %p102
      $region22: #{tpu_custom_call.1} parent=11 // pred_check_branch
        %214 = sbr.rel (%p212) target = $region24
      $region23: #{tpu_custom_call.1} parent=11 // pred_region
        _
      $region24: #{tpu_custom_call.1} parent=11 // pred_fallthru
        _
      // Predicated region
      $region25: #{tpu_custom_call.1} parent=11 // pred_check
        %p215 = pneg %p123
      $region26: #{tpu_custom_call.1} parent=11 // pred_check_branch
        %217 = sbr.rel (%p215) target = $region28
      $region27: #{tpu_custom_call.1} parent=11 // pred_region
        _
      $region28: #{tpu_custom_call.1} parent=11 // pred_fallthru
        _
      // Predicated region
      $region29: #{tpu_custom_call.1} parent=11 // pred_check
        %p218 = pneg %p144
      $region30: #{tpu_custom_call.1} parent=11 // pred_check_branch
        %220 = sbr.rel (%p218) target = $region32
      $region31: #{tpu_custom_call.1} parent=11 // pred_region
        _
      $region32: #{tpu_custom_call.1} parent=11 // pred_fallthru
        _
      // Predicated region
      $region33: #{tpu_custom_call.1} parent=11 // pred_check
        %p221 = pneg %p165
      $region34: #{tpu_custom_call.1} parent=11 // pred_check_branch
        %223 = sbr.rel (%p221) target = $region36
      $region35: #{tpu_custom_call.1} parent=11 // pred_region
        _
      $region36: #{tpu_custom_call.1} parent=11 // pred_fallthru
        _
    $region12: #{tpu_custom_call.1} parent=5 // pred_fallthru
      _
    %p224 = scmp.lt.s32.totalorder %s13, 2
    // Predicated region
    $region37: #{tpu_custom_call.1} parent=5 // pred_check
      %p225 = pneg %p224
    $region38: #{tpu_custom_call.1} parent=5 // pred_check_branch
      %227 = sbr.rel (%p225) target = $region40
    $region39: #{tpu_custom_call.1} parent=5 // pred_region
      // Predicated region
      $region41: #{tpu_custom_call.1} parent=39 // pred_check
        %p228 = pneg %p33
      $region42: #{tpu_custom_call.1} parent=39 // pred_check_branch
        %230 = sbr.rel (%p228) target = $region44
      $region43: #{tpu_custom_call.1} parent=39 // pred_region
        %p231 = scmp.lt.s32.totalorder %s13, 1
        %s232 = scalar_select %p231, %s13, 1
        %s233 = smul.addr %s232, 32
        %s234 = smul.addr %s233, 8
        %s235 = scalar_lea.vmem %s0, %s234
      $region44: #{tpu_custom_call.1} parent=39 // pred_fallthru
        _
    $region40: #{tpu_custom_call.1} parent=5 // pred_fallthru
      _
    %p236 = scmp.le.s32.totalorder 1, %s13
    %p237 = scmp.lt.s32.totalorder %s13, 3
    %p238 = pnand %p236, %p237
    %p239 = pneg %p238
    // Predicated region
    $region45: #{tpu_custom_call.1} parent=5 // pred_check
      _
    $region46: #{tpu_custom_call.1} parent=5 // pred_check_branch
      %241 = sbr.rel (%p238) target = $region48
    $region47: #{tpu_custom_call.1} parent=5 // pred_region
      %s242 = ssub.s32 %s13, 1
      %p243 = scmp.lt.s32.totalorder %s18, 1
      %s244 = scalar_select %p243, %s18, 1
      %s245 = smul.addr %s244, 32
      %s246 = smul.addr %s245, 8
      %s247 = scalar_lea.vmem %s0, %s246
      %p248 = pneg %p39
      %p249 = pneg %p36
      %p250 = pneg %p60
      %p251 = pneg %p57
      %p252 = pneg %p81
      %p253 = pneg %p78
      %p254 = pneg %p102
      %p255 = pneg %p99
      %p256 = pneg %p123
      %p257 = pneg %p120
      %p258 = pneg %p144
      %p259 = pneg %p141
      %p260 = pneg %p165
      %p261 = pneg %p162
      %p262 = pneg %p191
      %p263 = pneg %p188
      %p264 = scmp.lt.s32.totalorder %s18, 1
      %s265 = scalar_select %p264, %s18, 1
      %s266 = smul.addr %s265, 32
      %s267 = smul.addr %s266, 8
      %s268 = scalar_lea.vmem %s7, %s267
      %p269 = scmp.lt.s32.totalorder %s18, 1
      %s270 = scalar_select %p269, %s18, 1
      %s271 = smul.addr %s270, 32
      %s272 = smul.addr %s271, 8
      %s273 = scalar_lea.vmem %s0, %s272
      %p274 = scmp.lt.s32.totalorder %s18, 1
      %s275 = scalar_select %p274, %s18, 1
      %s276 = smul.addr %s275, 32
      %s277 = smul.addr %s276, 8
      %s278 = scalar_lea.vmem %s7, %s277
      %v279 = vld [vmem:[%s273] sm:$0xff]
      %v280 = vld [vmem:[%s273 + $0x8] sm:$0xff]
      %v281 = vld [vmem:[%s273 + $0x10] sm:$0xff]
      %v282 = vld [vmem:[%s273 + $0x18] sm:$0xff]
      %v283 = vld [vmem:[%s273 + $0x20] sm:$0xff]
      %v284 = vld [vmem:[%s273 + $0x28] sm:$0xff]
      %v285 = vld [vmem:[%s273 + $0x30] sm:$0xff]
      %v286 = vld [vmem:[%s273 + $0x38] sm:$0xff]
      %v287 = vld [vmem:[%s273 + $0x40] sm:$0xff]
      %v288 = vld [vmem:[%s273 + $0x48] sm:$0xff]
      %v289 = vld [vmem:[%s273 + $0x50] sm:$0xff]
      %v290 = vld [vmem:[%s273 + $0x58] sm:$0xff]
      %v291 = vld [vmem:[%s273 + $0x60] sm:$0xff]
      %v292 = vld [vmem:[%s273 + $0x68] sm:$0xff]
      %v293 = vld [vmem:[%s273 + $0x70] sm:$0xff]
      %v294 = vld [vmem:[%s273 + $0x78] sm:$0xff]
      %v295 = vld [vmem:[%s273 + $0x80] sm:$0xff]
      %v296 = vld [vmem:[%s273 + $0x88] sm:$0xff]
      %v297 = vld [vmem:[%s273 + $0x90] sm:$0xff]
      %v298 = vld [vmem:[%s273 + $0x98] sm:$0xff]
      %v299 = vld [vmem:[%s273 + $0xa0] sm:$0xff]
      %v300 = vld [vmem:[%s273 + $0xa8] sm:$0xff]
      %v301 = vld [vmem:[%s273 + $0xb0] sm:$0xff]
      %v302 = vld [vmem:[%s273 + $0xb8] sm:$0xff]
      %v303 = vld [vmem:[%s273 + $0xc0] sm:$0xff]
      %v304 = vld [vmem:[%s273 + $0xc8] sm:$0xff]
      %v305 = vld [vmem:[%s273 + $0xd0] sm:$0xff]
      %v306 = vld [vmem:[%s273 + $0xd8] sm:$0xff]
      %v307 = vld [vmem:[%s273 + $0xe0] sm:$0xff]
      %v308 = vld [vmem:[%s273 + $0xe8] sm:$0xff]
      %v309 = vld [vmem:[%s273 + $0xf0] sm:$0xff]
      %v310 = vld [vmem:[%s273 + $0xf8] sm:$0xff]
      %v311 = vld [vmem:[%s1] sm:$0xff]
      %v312 = vld [vmem:[%s1 + $0x8] sm:$0xff]
      %v313 = vld [vmem:[%s1 + $0x10] sm:$0xff]
      %v314 = vld [vmem:[%s1 + $0x18] sm:$0xff]
      %v315 = vld [vmem:[%s2] sm:$0x1]
      %v317 = vlaneseq
      %v318 = vshrl.u32 %v317, 7
      %v319 = vsub.s32 0, %v318
      %v320 = vrot.slane %v315, %v319
      %vm322 = vcmask 261120
      %v324 = vsel %vm322, %v279, 0
      %v327 = vsel %vm322, %v280, 0
      %v330 = vsel %vm322, %v281, 0
      %v333 = vsel %vm322, %v282, 0
      %v336 = vsel %vm322, %v283, 0
      %v339 = vsel %vm322, %v284, 0
      %v342 = vsel %vm322, %v285, 0
      %v345 = vsel %vm322, %v286, 0
      %v348 = vsel %vm322, %v287, 0
      %v351 = vsel %vm322, %v288, 0
      %v354 = vsel %vm322, %v289, 0
      %v357 = vsel %vm322, %v290, 0
      %v360 = vsel %vm322, %v291, 0
      %v363 = vsel %vm322, %v292, 0
      %v366 = vsel %vm322, %v293, 0
      %v369 = vsel %vm322, %v294, 0
      %v372 = vsel %vm322, %v295, 0
      %v375 = vsel %vm322, %v296, 0
      %v378 = vsel %vm322, %v297, 0
      %v381 = vsel %vm322, %v298, 0
      %v384 = vsel %vm322, %v299, 0
      %v387 = vsel %vm322, %v300, 0
      %v390 = vsel %vm322, %v301, 0
      %v393 = vsel %vm322, %v302, 0
      %v396 = vsel %vm322, %v303, 0
      %v399 = vsel %vm322, %v304, 0
      %v402 = vsel %vm322, %v305, 0
      %v405 = vsel %vm322, %v306, 0
      %v408 = vsel %vm322, %v307, 0
      %v411 = vsel %vm322, %v308, 0
      %v414 = vsel %vm322, %v309, 0
      %v417 = vsel %vm322, %v310, 0
      %419 = vmatprep.subr.mxu0 0.0
      %420 = vmatpush1.msra.mxu0 %v311
      %421 = vmatprep.subr.mxu0 0.0
      %422 = vmatpush1.msra.mxu0 %v312
      %423 = vmatprep.subr.mxu0 0.0
      %424 = vmatpush1.msra.mxu0 %v313
      %425 = vmatprep.subr.mxu0 0.0
      %426 = vmatpush1.msra.mxu0 %v314
      %427 = vmatprep.subr.mxu0 0.0
      %428 = vmatpush1.msra.mxu0 0.0
      %429 = vmatprep.subr.mxu0 0.0
      %430 = vmatpush1.msra.mxu0 0.0
      %431 = vmatprep.subr.mxu0 0.0
      %432 = vmatpush1.msra.mxu0 0.0
      %433 = vmatprep.subr.mxu0 0.0
      %434 = vmatpush1.msra.mxu0 0.0
      %435 = vmatprep.subr.mxu0 0.0
      %436 = vmatpush1.msra.mxu0 0.0
      %437 = vmatprep.subr.mxu0 0.0
      %438 = vmatpush1.msra.mxu0 0.0
      %439 = vmatprep.subr.mxu0 0.0
      %440 = vmatpush1.msra.mxu0 0.0
      %441 = vmatprep.subr.mxu0 0.0
      %442 = vmatpush1.msra.mxu0 0.0
      %443 = vmatprep.subr.mxu0 0.0
      %444 = vmatpush1.msra.mxu0 0.0
      %445 = vmatprep.subr.mxu0 0.0
      %446 = vmatpush1.msra.mxu0 0.0
      %447 = vmatprep.subr.mxu0 0.0
      %448 = vmatpush1.msra.mxu0 0.0
      %449 = vmatprep.subr.mxu0 0.0
      %450 = vmatpush1.msra.mxu0 0.0
      %451 = vmatprep.subr.mxu0 0.0
      %452 = vmatpush1.msra.mxu0 0.0
      %453 = vmatprep.subr.mxu0 0.0
      %454 = vmatpush1.msra.mxu0 0.0
      %455 = vmatprep.subr.mxu0 0.0
      %456 = vmatpush1.msra.mxu0 0.0
      %457 = vmatprep.subr.mxu0 0.0
      %458 = vmatpush1.msra.mxu0 0.0
      %459 = vmatprep.subr.mxu0 0.0
      %460 = vmatpush1.msra.mxu0 0.0
      %461 = vmatprep.subr.mxu0 0.0
      %462 = vmatpush1.msra.mxu0 0.0
      %463 = vmatprep.subr.mxu0 0.0
      %464 = vmatpush1.msra.mxu0 0.0
      %465 = vmatprep.subr.mxu0 0.0
      %466 = vmatpush1.msra.mxu0 0.0
      %467 = vmatprep.subr.mxu0 0.0
      %468 = vmatpush1.msra.mxu0 0.0
      %469 = vmatprep.subr.mxu0 0.0
      %470 = vmatpush1.msra.mxu0 0.0
      %471 = vmatprep.subr.mxu0 0.0
      %472 = vmatpush1.msra.mxu0 0.0
      %473 = vmatprep.subr.mxu0 0.0
      %474 = vmatpush1.msra.mxu0 0.0
      %475 = vmatprep.subr.mxu0 0.0
      %476 = vmatpush1.msra.mxu0 0.0
      %477 = vmatprep.subr.mxu0 0.0
      %478 = vmatpush1.msra.mxu0 0.0
      %479 = vmatprep.subr.mxu0 0.0
      %480 = vmatpush1.msra.mxu0 0.0
      %481 = vmatprep.subr.mxu0 0.0
      %482 = vmatpush1.msra.mxu0 0.0
      %483 = vmatprep.mubr.f32.mxu0 0.0
      %484 = vmatmul.mubr.f32.gmra.mrb[0].mxu0 %v324
      %v485 = vpop.f32.mrb[0].mxu0
      %v486 = vadd.f32 %v320, %v485
      %v487 = vpop.f32.mrb[0].mxu0
      %488 = vmatprep.mubr.f32.mxu0 0.0
      %489 = vmatmul.mubr.f32.gmra.mrb[0].mxu0 %v327
      %v490 = vpop.f32.mrb[0].mxu0
      %v491 = vadd.f32 %v320, %v490
      %v492 = vpop.f32.mrb[0].mxu0
      %493 = vmatprep.mubr.f32.mxu0 0.0
      %494 = vmatmul.mubr.f32.gmra.mrb[0].mxu0 %v330
      %v495 = vpop.f32.mrb[0].mxu0
      %v496 = vadd.f32 %v320, %v495
      %v497 = vpop.f32.mrb[0].mxu0
      %498 = vmatprep.mubr.f32.mxu0 0.0
      %499 = vmatmul.mubr.f32.gmra.mrb[0].mxu0 %v333
      %v500 = vpop.f32.mrb[0].mxu0
      %v501 = vadd.f32 %v320, %v500
      %v502 = vpop.f32.mrb[0].mxu0
      %503 = vmatprep.mubr.f32.mxu0 0.0
      %504 = vmatmul.mubr.f32.gmra.mrb[0].mxu0 %v336
      %v505 = vpop.f32.mrb[0].mxu0
      %v506 = vadd.f32 %v320, %v505
      %v507 = vpop.f32.mrb[0].mxu0
      %508 = vmatprep.mubr.f32.mxu0 0.0
      %509 = vmatmul.mubr.f32.gmra.mrb[0].mxu0 %v339
      %v510 = vpop.f32.mrb[0].mxu0
      %v511 = vadd.f32 %v320, %v510
      %v512 = vpop.f32.mrb[0].mxu0
      %513 = vmatprep.mubr.f32.mxu0 0.0
      %514 = vmatmul.mubr.f32.gmra.mrb[0].mxu0 %v342
      %v515 = vpop.f32.mrb[0].mxu0
      %v516 = vadd.f32 %v320, %v515
      %v517 = vpop.f32.mrb[0].mxu0
      %518 = vmatprep.mubr.f32.mxu0 0.0
      %519 = vmatmul.mubr.f32.gmra.mrb[0].mxu0 %v345
      %v520 = vpop.f32.mrb[0].mxu0
      %v521 = vadd.f32 %v320, %v520
      %v522 = vpop.f32.mrb[0].mxu0
      %523 = vmatprep.mubr.f32.mxu0 0.0
      %524 = vmatmul.mubr.f32.gmra.mrb[0].mxu0 %v348
      %v525 = vpop.f32.mrb[0].mxu0
      %v526 = vadd.f32 %v320, %v525
      %v527 = vpop.f32.mrb[0].mxu0
      %528 = vmatprep.mubr.f32.mxu0 0.0
      %529 = vmatmul.mubr.f32.gmra.mrb[0].mxu0 %v351
      %v530 = vpop.f32.mrb[0].mxu0
      %v531 = vadd.f32 %v320, %v530
      %v532 = vpop.f32.mrb[0].mxu0
      %533 = vmatprep.mubr.f32.mxu0 0.0
      %534 = vmatmul.mubr.f32.gmra.mrb[0].mxu0 %v354
      %v535 = vpop.f32.mrb[0].mxu0
      %v536 = vadd.f32 %v320, %v535
      %v537 = vpop.f32.mrb[0].mxu0
      %538 = vmatprep.mubr.f32.mxu0 0.0
      %539 = vmatmul.mubr.f32.gmra.mrb[0].mxu0 %v357
      %v540 = vpop.f32.mrb[0].mxu0
      %v541 = vadd.f32 %v320, %v540
      %v542 = vpop.f32.mrb[0].mxu0
      %543 = vmatprep.mubr.f32.mxu0 0.0
      %544 = vmatmul.mubr.f32.gmra.mrb[0].mxu0 %v360
      %v545 = vpop.f32.mrb[0].mxu0
      %v546 = vadd.f32 %v320, %v545
      %v547 = vpop.f32.mrb[0].mxu0
      %548 = vmatprep.mubr.f32.mxu0 0.0
      %549 = vmatmul.mubr.f32.gmra.mrb[0].mxu0 %v363
      %v550 = vpop.f32.mrb[0].mxu0
      %v551 = vadd.f32 %v320, %v550
      %v552 = vpop.f32.mrb[0].mxu0
      %553 = vmatprep.mubr.f32.mxu0 0.0
      %554 = vmatmul.mubr.f32.gmra.mrb[0].mxu0 %v366
      %v555 = vpop.f32.mrb[0].mxu0
      %v556 = vadd.f32 %v320, %v555
      %v557 = vpop.f32.mrb[0].mxu0
      %558 = vmatprep.mubr.f32.mxu0 0.0
      %559 = vmatmul.mubr.f32.gmra.mrb[0].mxu0 %v369
      %v560 = vpop.f32.mrb[0].mxu0
      %v561 = vadd.f32 %v320, %v560
      %v562 = vpop.f32.mrb[0].mxu0
      %563 = vmatprep.mubr.f32.mxu0 0.0
      %564 = vmatmul.mubr.f32.gmra.mrb[0].mxu0 %v372
      %v565 = vpop.f32.mrb[0].mxu0
      %v566 = vadd.f32 %v320, %v565
      %v567 = vpop.f32.mrb[0].mxu0
      %568 = vmatprep.mubr.f32.mxu0 0.0
      %569 = vmatmul.mubr.f32.gmra.mrb[0].mxu0 %v375
      %v570 = vpop.f32.mrb[0].mxu0
      %v571 = vadd.f32 %v320, %v570
      %v572 = vpop.f32.mrb[0].mxu0
      %573 = vmatprep.mubr.f32.mxu0 0.0
      %574 = vmatmul.mubr.f32.gmra.mrb[0].mxu0 %v378
      %v575 = vpop.f32.mrb[0].mxu0
      %v576 = vadd.f32 %v320, %v575
      %v577 = vpop.f32.mrb[0].mxu0
      %578 = vmatprep.mubr.f32.mxu0 0.0
      %579 = vmatmul.mubr.f32.gmra.mrb[0].mxu0 %v381
      %v580 = vpop.f32.mrb[0].mxu0
      %v581 = vadd.f32 %v320, %v580
      %v582 = vpop.f32.mrb[0].mxu0
      %583 = vmatprep.mubr.f32.mxu0 0.0
      %584 = vmatmul.mubr.f32.gmra.mrb[0].mxu0 %v384
      %v585 = vpop.f32.mrb[0].mxu0
      %v586 = vadd.f32 %v320, %v585
      %v587 = vpop.f32.mrb[0].mxu0
      %588 = vmatprep.mubr.f32.mxu0 0.0
      %589 = vmatmul.mubr.f32.gmra.mrb[0].mxu0 %v387
      %v590 = vpop.f32.mrb[0].mxu0
      %v591 = vadd.f32 %v320, %v590
      %v592 = vpop.f32.mrb[0].mxu0
      %593 = vmatprep.mubr.f32.mxu0 0.0
      %594 = vmatmul.mubr.f32.gmra.mrb[0].mxu0 %v390
      %v595 = vpop.f32.mrb[0].mxu0
      %v596 = vadd.f32 %v320, %v595
      %v597 = vpop.f32.mrb[0].mxu0
      %598 = vmatprep.mubr.f32.mxu0 0.0
      %599 = vmatmul.mubr.f32.gmra.mrb[0].mxu0 %v393
      %v600 = vpop.f32.mrb[0].mxu0
      %v601 = vadd.f32 %v320, %v600
      %v602 = vpop.f32.mrb[0].mxu0
      %603 = vmatprep.mubr.f32.mxu0 0.0
      %604 = vmatmul.mubr.f32.gmra.mrb[0].mxu0 %v396
      %v605 = vpop.f32.mrb[0].mxu0
      %v606 = vadd.f32 %v320, %v605
      %v607 = vpop.f32.mrb[0].mxu0
      %608 = vmatprep.mubr.f32.mxu0 0.0
      %609 = vmatmul.mubr.f32.gmra.mrb[0].mxu0 %v399
      %v610 = vpop.f32.mrb[0].mxu0
      %v611 = vadd.f32 %v320, %v610
      %v612 = vpop.f32.mrb[0].mxu0
      %613 = vmatprep.mubr.f32.mxu0 0.0
      %614 = vmatmul.mubr.f32.gmra.mrb[0].mxu0 %v402
      %v615 = vpop.f32.mrb[0].mxu0
      %v616 = vadd.f32 %v320, %v615
      %v617 = vpop.f32.mrb[0].mxu0
      %618 = vmatprep.mubr.f32.mxu0 0.0
      %619 = vmatmul.mubr.f32.gmra.mrb[0].mxu0 %v405
      %v620 = vpop.f32.mrb[0].mxu0
      %v621 = vadd.f32 %v320, %v620
      %v622 = vpop.f32.mrb[0].mxu0
      %623 = vmatprep.mubr.f32.mxu0 0.0
      %624 = vmatmul.mubr.f32.gmra.mrb[0].mxu0 %v408
      %v625 = vpop.f32.mrb[0].mxu0
      %v626 = vadd.f32 %v320, %v625
      %v627 = vpop.f32.mrb[0].mxu0
      %628 = vmatprep.mubr.f32.mxu0 0.0
      %629 = vmatmul.mubr.f32.gmra.mrb[0].mxu0 %v411
      %v630 = vpop.f32.mrb[0].mxu0
      %v631 = vadd.f32 %v320, %v630
      %v632 = vpop.f32.mrb[0].mxu0
      %633 = vmatprep.mubr.f32.mxu0 0.0
      %634 = vmatmul.mubr.f32.gmra.mrb[0].mxu0 %v414
      %v635 = vpop.f32.mrb[0].mxu0
      %v636 = vadd.f32 %v320, %v635
      %v637 = vpop.f32.mrb[0].mxu0
      %638 = vmatprep.mubr.f32.mxu0 0.0
      %639 = vmatmul.mubr.f32.gmra.mrb[0].mxu0 %v417
      %v640 = vpop.f32.mrb[0].mxu0
      %v641 = vadd.f32 %v320, %v640
      %v642 = vpop.f32.mrb[0].mxu0
      %643 = vdwg.mxu0
      %s644 = scalar_lea.vmem [#allocation2], 24
      %645 = vst [vmem:[%s644 + $0x1] sm:$0xff] %v486
      %646 = vst [vmem:[%s644 + $0x9] sm:$0xff] %v491
      %647 = vst [vmem:[%s644 + $0x19] sm:$0xff] %v496
      %648 = vst [vmem:[%s644 + $0x21] sm:$0xff] %v501
      %649 = vst [vmem:[%s644 + $0x31] sm:$0xff] %v506
      %650 = vst [vmem:[%s644 + $0x39] sm:$0xff] %v511
      %651 = vst [vmem:[%s644 + $0x49] sm:$0xff] %v516
      %652 = vst [vmem:[%s644 + $0x51] sm:$0xff] %v521
      %653 = vst [vmem:[%s644 + $0x61] sm:$0xff] %v526
      %654 = vst [vmem:[%s644 + $0x69] sm:$0xff] %v531
      %655 = vst [vmem:[%s644 + $0x79] sm:$0xff] %v536
      %656 = vst [vmem:[%s644 + $0x81] sm:$0xff] %v541
      %657 = vst [vmem:[%s644 + $0x91] sm:$0xff] %v546
      %658 = vst [vmem:[%s644 + $0x99] sm:$0xff] %v551
      %659 = vst [vmem:[%s644 + $0xa9] sm:$0xff] %v556
      %660 = vst [vmem:[%s644 + $0xb1] sm:$0xff] %v561
      %661 = vst [vmem:[%s644 + $0xc1] sm:$0xff] %v566
      %662 = vst [vmem:[%s644 + $0xc9] sm:$0xff] %v571
      %663 = vst [vmem:[%s644 + $0xd9] sm:$0xff] %v576
      %664 = vst [vmem:[%s644 + $0xe1] sm:$0xff] %v581
      %665 = vst [vmem:[%s644 + $0xf1] sm:$0xff] %v586
      %666 = vst [vmem:[%s644 + $0xf9] sm:$0xff] %v591
      %667 = vst [vmem:[%s644 + $0x109] sm:$0xff] %v596
      %668 = vst [vmem:[%s644 + $0x111] sm:$0xff] %v601
      %669 = vst [vmem:[%s644 + $0x121] sm:$0xff] %v606
      %670 = vst [vmem:[%s644 + $0x129] sm:$0xff] %v611
      %671 = vst [vmem:[%s644 + $0x139] sm:$0xff] %v616
      %672 = vst [vmem:[%s644 + $0x141] sm:$0xff] %v621
      %673 = vst [vmem:[%s644 + $0x151] sm:$0xff] %v626
      %674 = vst [vmem:[%s644 + $0x159] sm:$0xff] %v631
      %675 = vst [vmem:[%s644 + $0x169] sm:$0xff] %v636
      %676 = vst [vmem:[%s644 + $0x171] sm:$0xff] %v641
      %677 = vst [vmem:[#allocation2] sm:$0xff] 0.0
      %678 = vst [vmem:[#allocation2 + $0x8] sm:$0xff] 0.0
      %679 = vst [vmem:[#allocation2 + $0x10] sm:$0x3] 0.0
      %s680 = scalar_lea.vmem [#allocation2], 408
      %681 = vst [vmem:[%s680] sm:$0xff] 0.0
      %682 = vst [vmem:[%s680 + $0x8] sm:$0xff] 0.0
      %683 = vst [vmem:[%s680 + $0x10] sm:$0x3] 0.0
      %684 = vst [vmem:[%s644] sm:$0x1] 0.0
      %685 = vst [vmem:[%s644 + $0x18] sm:$0x1] 0.0
      %686 = vst [vmem:[%s644 + $0x30] sm:$0x1] 0.0
      %687 = vst [vmem:[%s644 + $0x48] sm:$0x1] 0.0
      %688 = vst [vmem:[%s644 + $0x60] sm:$0x1] 0.0
      %689 = vst [vmem:[%s644 + $0x78] sm:$0x1] 0.0
      %690 = vst [vmem:[%s644 + $0x90] sm:$0x1] 0.0
      %691 = vst [vmem:[%s644 + $0xa8] sm:$0x1] 0.0
      %692 = vst [vmem:[%s644 + $0xc0] sm:$0x1] 0.0
      %693 = vst [vmem:[%s644 + $0xd8] sm:$0x1] 0.0
      %694 = vst [vmem:[%s644 + $0xf0] sm:$0x1] 0.0
      %695 = vst [vmem:[%s644 + $0x108] sm:$0x1] 0.0
      %696 = vst [vmem:[%s644 + $0x120] sm:$0x1] 0.0
      %697 = vst [vmem:[%s644 + $0x138] sm:$0x1] 0.0
      %698 = vst [vmem:[%s644 + $0x150] sm:$0x1] 0.0
      %699 = vst [vmem:[%s644 + $0x168] sm:$0x1] 0.0
      %700 = vst [vmem:[%s644 + $0x11] sm:$0x1] 0.0
      %701 = vst [vmem:[%s644 + $0x29] sm:$0x1] 0.0
      %702 = vst [vmem:[%s644 + $0x41] sm:$0x1] 0.0
      %703 = vst [vmem:[%s644 + $0x59] sm:$0x1] 0.0
      %704 = vst [vmem:[%s644 + $0x71] sm:$0x1] 0.0
      %705 = vst [vmem:[%s644 + $0x89] sm:$0x1] 0.0
      %706 = vst [vmem:[%s644 + $0xa1] sm:$0x1] 0.0
      %707 = vst [vmem:[%s644 + $0xb9] sm:$0x1] 0.0
      %708 = vst [vmem:[%s644 + $0xd1] sm:$0x1] 0.0
      %709 = vst [vmem:[%s644 + $0xe9] sm:$0x1] 0.0
      %710 = vst [vmem:[%s644 + $0x101] sm:$0x1] 0.0
      %711 = vst [vmem:[%s644 + $0x119] sm:$0x1] 0.0
      %712 = vst [vmem:[%s644 + $0x131] sm:$0x1] 0.0
      %713 = vst [vmem:[%s644 + $0x149] sm:$0x1] 0.0
      %714 = vst [vmem:[%s644 + $0x161] sm:$0x1] 0.0
      %715 = vst [vmem:[%s644 + $0x179] sm:$0x1] 0.0
      %v716 = vld [vmem:[%s3] sm:$0xff]
      %v717 = vld [vmem:[%s3 + $0x8] sm:$0x1]
      %v718 = vld [vmem:[#allocation2] sm:$0xff]
      %v719 = vld [vmem:[#allocation2 + $0x8] sm:$0xff]
      %v720 = vld [vmem:[#allocation2 + $0x18] sm:$0xff]
      %v721 = vld [vmem:[#allocation2 + $0x20] sm:$0xff]
      %v722 = vld [vmem:[#allocation2 + $0x30] sm:$0xff]
      %v723 = vld [vmem:[#allocation2 + $0x38] sm:$0xff]
      %v724 = vld [vmem:[#allocation2 + $0x48] sm:$0xff]
      %v725 = vld [vmem:[#allocation2 + $0x50] sm:$0xff]
      %v726 = vld [vmem:[#allocation2 + $0x60] sm:$0xff]
      %v727 = vld [vmem:[#allocation2 + $0x68] sm:$0xff]
      %v728 = vld [vmem:[#allocation2 + $0x78] sm:$0xff]
      %v729 = vld [vmem:[#allocation2 + $0x80] sm:$0xff]
      %v730 = vld [vmem:[#allocation2 + $0x90] sm:$0xff]
      %v731 = vld [vmem:[#allocation2 + $0x98] sm:$0xff]
      %v732 = vld [vmem:[#allocation2 + $0xa8] sm:$0xff]
      %v733 = vld [vmem:[#allocation2 + $0xb0] sm:$0xff]
      %v734 = vld [vmem:[#allocation2 + $0xc0] sm:$0xff]
      %v735 = vld [vmem:[#allocation2 + $0xc8] sm:$0xff]
      %v736 = vld [vmem:[#allocation2 + $0xd8] sm:$0xff]
      %v737 = vld [vmem:[#allocation2 + $0xe0] sm:$0xff]
      %v738 = vld [vmem:[#allocation2 + $0xf0] sm:$0xff]
      %v739 = vld [vmem:[#allocation2 + $0xf8] sm:$0xff]
      %v740 = vld [vmem:[#allocation2 + $0x108] sm:$0xff]
      %v741 = vld [vmem:[#allocation2 + $0x110] sm:$0xff]
      %v742 = vld [vmem:[#allocation2 + $0x120] sm:$0xff]
      %v743 = vld [vmem:[#allocation2 + $0x128] sm:$0xff]
      %v744 = vld [vmem:[#allocation2 + $0x138] sm:$0xff]
      %v745 = vld [vmem:[#allocation2 + $0x140] sm:$0xff]
      %v746 = vld [vmem:[#allocation2 + $0x150] sm:$0xff]
      %v747 = vld [vmem:[#allocation2 + $0x158] sm:$0xff]
      %v748 = vld [vmem:[#allocation2 + $0x168] sm:$0xff]
      %v749 = vld [vmem:[#allocation2 + $0x170] sm:$0xff]
      %v750 = vlaneseq
      %v751 = vshrl.u32 %v750, 7
      %v752 = vsub.s32 0, %v751
      %v753 = vrot.slane %v716, %v752
      %v754 = vmul.f32 %v718, %v753
      %v755 = vmul.f32 %v719, %v753
      %v756 = vmul.f32 %v720, %v753
      %v757 = vmul.f32 %v721, %v753
      %v758 = vmul.f32 %v722, %v753
      %v759 = vmul.f32 %v723, %v753
      %v760 = vmul.f32 %v724, %v753
      %v761 = vmul.f32 %v725, %v753
      %v762 = vmul.f32 %v726, %v753
      %v763 = vmul.f32 %v727, %v753
      %v764 = vmul.f32 %v728, %v753
      %v765 = vmul.f32 %v729, %v753
      %v766 = vmul.f32 %v730, %v753
      %v767 = vmul.f32 %v731, %v753
      %v768 = vmul.f32 %v732, %v753
      %v769 = vmul.f32 %v733, %v753
      %v770 = vmul.f32 %v734, %v753
      %v771 = vmul.f32 %v735, %v753
      %v772 = vmul.f32 %v736, %v753
      %v773 = vmul.f32 %v737, %v753
      %v774 = vmul.f32 %v738, %v753
      %v775 = vmul.f32 %v739, %v753
      %v776 = vmul.f32 %v740, %v753
      %v777 = vmul.f32 %v741, %v753
      %v778 = vmul.f32 %v742, %v753
      %v779 = vmul.f32 %v743, %v753
      %v780 = vmul.f32 %v744, %v753
      %v781 = vmul.f32 %v745, %v753
      %v782 = vmul.f32 %v746, %v753
      %v783 = vmul.f32 %v747, %v753
      %v784 = vmul.f32 %v748, %v753
      %v785 = vmul.f32 %v749, %v753
      %v786 = vadd.f32 %v754, 0.0
      %v787 = vadd.f32 %v755, 0.0
      %v788 = vadd.f32 %v756, 0.0
      %v789 = vadd.f32 %v757, 0.0
      %v790 = vadd.f32 %v758, 0.0
      %v791 = vadd.f32 %v759, 0.0
      %v792 = vadd.f32 %v760, 0.0
      %v793 = vadd.f32 %v761, 0.0
      %v794 = vadd.f32 %v762, 0.0
      %v795 = vadd.f32 %v763, 0.0
      %v796 = vadd.f32 %v764, 0.0
      %v797 = vadd.f32 %v765, 0.0
      %v798 = vadd.f32 %v766, 0.0
      %v799 = vadd.f32 %v767, 0.0
      %v800 = vadd.f32 %v768, 0.0
      %v801 = vadd.f32 %v769, 0.0
      %v802 = vadd.f32 %v770, 0.0
      %v803 = vadd.f32 %v771, 0.0
      %v804 = vadd.f32 %v772, 0.0
      %v805 = vadd.f32 %v773, 0.0
      %v806 = vadd.f32 %v774, 0.0
      %v807 = vadd.f32 %v775, 0.0
      %v808 = vadd.f32 %v776, 0.0
      %v809 = vadd.f32 %v777, 0.0
      %v810 = vadd.f32 %v778, 0.0
      %v811 = vadd.f32 %v779, 0.0
      %v812 = vadd.f32 %v780, 0.0
      %v813 = vadd.f32 %v781, 0.0
      %v814 = vadd.f32 %v782, 0.0
      %v815 = vadd.f32 %v783, 0.0
      %v816 = vadd.f32 %v784, 0.0
      %v817 = vadd.f32 %v785, 0.0
      %v818 = vld [vmem:[#allocation2 + $0x1] sm:$0xff]
      %v819 = vld [vmem:[#allocation2 + $0x9] sm:$0xff]
      %v820 = vld [vmem:[#allocation2 + $0x19] sm:$0xff]
      %v821 = vld [vmem:[#allocation2 + $0x21] sm:$0xff]
      %v822 = vld [vmem:[#allocation2 + $0x31] sm:$0xff]
      %v823 = vld [vmem:[#allocation2 + $0x39] sm:$0xff]
      %v824 = vld [vmem:[#allocation2 + $0x49] sm:$0xff]
      %v825 = vld [vmem:[#allocation2 + $0x51] sm:$0xff]
      %v826 = vld [vmem:[#allocation2 + $0x61] sm:$0xff]
      %v827 = vld [vmem:[#allocation2 + $0x69] sm:$0xff]
      %v828 = vld [vmem:[#allocation2 + $0x79] sm:$0xff]
      %v829 = vld [vmem:[#allocation2 + $0x81] sm:$0xff]
      %v830 = vld [vmem:[#allocation2 + $0x91] sm:$0xff]
      %v831 = vld [vmem:[#allocation2 + $0x99] sm:$0xff]
      %v832 = vld [vmem:[#allocation2 + $0xa9] sm:$0xff]
      %v833 = vld [vmem:[#allocation2 + $0xb1] sm:$0xff]
      %v834 = vld [vmem:[#allocation2 + $0xc1] sm:$0xff]
      %v835 = vld [vmem:[#allocation2 + $0xc9] sm:$0xff]
      %v836 = vld [vmem:[#allocation2 + $0xd9] sm:$0xff]
      %v837 = vld [vmem:[#allocation2 + $0xe1] sm:$0xff]
      %v838 = vld [vmem:[#allocation2 + $0xf1] sm:$0xff]
      %v839 = vld [vmem:[#allocation2 + $0xf9] sm:$0xff]
      %v840 = vld [vmem:[#allocation2 + $0x109] sm:$0xff]
      %v841 = vld [vmem:[#allocation2 + $0x111] sm:$0xff]
      %v842 = vld [vmem:[#allocation2 + $0x121] sm:$0xff]
      %v843 = vld [vmem:[#allocation2 + $0x129] sm:$0xff]
      %v844 = vld [vmem:[#allocation2 + $0x139] sm:$0xff]
      %v845 = vld [vmem:[#allocation2 + $0x141] sm:$0xff]
      %v846 = vld [vmem:[#allocation2 + $0x151] sm:$0xff]
      %v847 = vld [vmem:[#allocation2 + $0x159] sm:$0xff]
      %v848 = vld [vmem:[#allocation2 + $0x169] sm:$0xff]
      %v849 = vld [vmem:[#allocation2 + $0x171] sm:$0xff]
      %v850 = vlaneseq
      %v851 = vshrl.u32 %v850, 7
      %v852 = vsub.s32 1, %v851
      %v853 = vrot.slane %v716, %v852
      %v854 = vmul.f32 %v818, %v853
      %v855 = vmul.f32 %v819, %v853
      %v856 = vmul.f32 %v820, %v853
      %v857 = vmul.f32 %v821, %v853
      %v858 = vmul.f32 %v822, %v853
      %v859 = vmul.f32 %v823, %v853
      %v860 = vmul.f32 %v824, %v853
      %v861 = vmul.f32 %v825, %v853
      %v862 = vmul.f32 %v826, %v853
      %v863 = vmul.f32 %v827, %v853
      %v864 = vmul.f32 %v828, %v853
      %v865 = vmul.f32 %v829, %v853
      %v866 = vmul.f32 %v830, %v853
      %v867 = vmul.f32 %v831, %v853
      %v868 = vmul.f32 %v832, %v853
      %v869 = vmul.f32 %v833, %v853
      %v870 = vmul.f32 %v834, %v853
      %v871 = vmul.f32 %v835, %v853
      %v872 = vmul.f32 %v836, %v853
      %v873 = vmul.f32 %v837, %v853
      %v874 = vmul.f32 %v838, %v853
      %v875 = vmul.f32 %v839, %v853
      %v876 = vmul.f32 %v840, %v853
      %v877 = vmul.f32 %v841, %v853
      %v878 = vmul.f32 %v842, %v853
      %v879 = vmul.f32 %v843, %v853
      %v880 = vmul.f32 %v844, %v853
      %v881 = vmul.f32 %v845, %v853
      %v882 = vmul.f32 %v846, %v853
      %v883 = vmul.f32 %v847, %v853
      %v884 = vmul.f32 %v848, %v853
      %v885 = vmul.f32 %v849, %v853
      %v886 = vadd.f32 %v786, %v854
      %v887 = vadd.f32 %v787, %v855
      %v888 = vadd.f32 %v788, %v856
      %v889 = vadd.f32 %v789, %v857
      %v890 = vadd.f32 %v790, %v858
      %v891 = vadd.f32 %v791, %v859
      %v892 = vadd.f32 %v792, %v860
      %v893 = vadd.f32 %v793, %v861
      %v894 = vadd.f32 %v794, %v862
      %v895 = vadd.f32 %v795, %v863
      %v896 = vadd.f32 %v796, %v864
      %v897 = vadd.f32 %v797, %v865
      %v898 = vadd.f32 %v798, %v866
      %v899 = vadd.f32 %v799, %v867
      %v900 = vadd.f32 %v800, %v868
      %v901 = vadd.f32 %v801, %v869
      %v902 = vadd.f32 %v802, %v870
      %v903 = vadd.f32 %v803, %v871
      %v904 = vadd.f32 %v804, %v872
      %v905 = vadd.f32 %v805, %v873
      %v906 = vadd.f32 %v806, %v874
      %v907 = vadd.f32 %v807, %v875
      %v908 = vadd.f32 %v808, %v876
      %v909 = vadd.f32 %v809, %v877
      %v910 = vadd.f32 %v810, %v878
      %v911 = vadd.f32 %v811, %v879
      %v912 = vadd.f32 %v812, %v880
      %v913 = vadd.f32 %v813, %v881
      %v914 = vadd.f32 %v814, %v882
      %v915 = vadd.f32 %v815, %v883
      %v916 = vadd.f32 %v816, %v884
      %v917 = vadd.f32 %v817, %v885
      %v918 = vld [vmem:[#allocation2 + $0x2] sm:$0xff]
      %v919 = vld [vmem:[#allocation2 + $0xa] sm:$0xff]
      %v920 = vld [vmem:[#allocation2 + $0x1a] sm:$0xff]
      %v921 = vld [vmem:[#allocation2 + $0x22] sm:$0xff]
      %v922 = vld [vmem:[#allocation2 + $0x32] sm:$0xff]
      %v923 = vld [vmem:[#allocation2 + $0x3a] sm:$0xff]
      %v924 = vld [vmem:[#allocation2 + $0x4a] sm:$0xff]
      %v925 = vld [vmem:[#allocation2 + $0x52] sm:$0xff]
      %v926 = vld [vmem:[#allocation2 + $0x62] sm:$0xff]
      %v927 = vld [vmem:[#allocation2 + $0x6a] sm:$0xff]
      %v928 = vld [vmem:[#allocation2 + $0x7a] sm:$0xff]
      %v929 = vld [vmem:[#allocation2 + $0x82] sm:$0xff]
      %v930 = vld [vmem:[#allocation2 + $0x92] sm:$0xff]
      %v931 = vld [vmem:[#allocation2 + $0x9a] sm:$0xff]
      %v932 = vld [vmem:[#allocation2 + $0xaa] sm:$0xff]
      %v933 = vld [vmem:[#allocation2 + $0xb2] sm:$0xff]
      %v934 = vld [vmem:[#allocation2 + $0xc2] sm:$0xff]
      %v935 = vld [vmem:[#allocation2 + $0xca] sm:$0xff]
      %v936 = vld [vmem:[#allocation2 + $0xda] sm:$0xff]
      %v937 = vld [vmem:[#allocation2 + $0xe2] sm:$0xff]
      %v938 = vld [vmem:[#allocation2 + $0xf2] sm:$0xff]
      %v939 = vld [vmem:[#allocation2 + $0xfa] sm:$0xff]
      %v940 = vld [vmem:[#allocation2 + $0x10a] sm:$0xff]
      %v941 = vld [vmem:[#allocation2 + $0x112] sm:$0xff]
      %v942 = vld [vmem:[#allocation2 + $0x122] sm:$0xff]
      %v943 = vld [vmem:[#allocation2 + $0x12a] sm:$0xff]
      %v944 = vld [vmem:[#allocation2 + $0x13a] sm:$0xff]
      %v945 = vld [vmem:[#allocation2 + $0x142] sm:$0xff]
      %v946 = vld [vmem:[#allocation2 + $0x152] sm:$0xff]
      %v947 = vld [vmem:[#allocation2 + $0x15a] sm:$0xff]
      %v948 = vld [vmem:[#allocation2 + $0x16a] sm:$0xff]
      %v949 = vld [vmem:[#allocation2 + $0x172] sm:$0xff]
      %v950 = vlaneseq
      %v951 = vshrl.u32 %v950, 7
      %v952 = vsub.s32 2, %v951
      %v953 = vrot.slane %v716, %v952
      %v954 = vmul.f32 %v918, %v953
      %v955 = vmul.f32 %v919, %v953
      %v956 = vmul.f32 %v920, %v953
      %v957 = vmul.f32 %v921, %v953
      %v958 = vmul.f32 %v922, %v953
      %v959 = vmul.f32 %v923, %v953
      %v960 = vmul.f32 %v924, %v953
      %v961 = vmul.f32 %v925, %v953
      %v962 = vmul.f32 %v926, %v953
      %v963 = vmul.f32 %v927, %v953
      %v964 = vmul.f32 %v928, %v953
      %v965 = vmul.f32 %v929, %v953
      %v966 = vmul.f32 %v930, %v953
      %v967 = vmul.f32 %v931, %v953
      %v968 = vmul.f32 %v932, %v953
      %v969 = vmul.f32 %v933, %v953
      %v970 = vmul.f32 %v934, %v953
      %v971 = vmul.f32 %v935, %v953
      %v972 = vmul.f32 %v936, %v953
      %v973 = vmul.f32 %v937, %v953
      %v974 = vmul.f32 %v938, %v953
      %v975 = vmul.f32 %v939, %v953
      %v976 = vmul.f32 %v940, %v953
      %v977 = vmul.f32 %v941, %v953
      %v978 = vmul.f32 %v942, %v953
      %v979 = vmul.f32 %v943, %v953
      %v980 = vmul.f32 %v944, %v953
      %v981 = vmul.f32 %v945, %v953
      %v982 = vmul.f32 %v946, %v953
      %v983 = vmul.f32 %v947, %v953
      %v984 = vmul.f32 %v948, %v953
      %v985 = vmul.f32 %v949, %v953
      %v986 = vadd.f32 %v886, %v954
      %v987 = vadd.f32 %v887, %v955
      %v988 = vadd.f32 %v888, %v956
      %v989 = vadd.f32 %v889, %v957
      %v990 = vadd.f32 %v890, %v958
      %v991 = vadd.f32 %v891, %v959
      %v992 = vadd.f32 %v892, %v960
      %v993 = vadd.f32 %v893, %v961
      %v994 = vadd.f32 %v894, %v962
      %v995 = vadd.f32 %v895, %v963
      %v996 = vadd.f32 %v896, %v964
      %v997 = vadd.f32 %v897, %v965
      %v998 = vadd.f32 %v898, %v966
      %v999 = vadd.f32 %v899, %v967
      %v1000 = vadd.f32 %v900, %v968
      %v1001 = vadd.f32 %v901, %v969
      %v1002 = vadd.f32 %v902, %v970
      %v1003 = vadd.f32 %v903, %v971
      %v1004 = vadd.f32 %v904, %v972
      %v1005 = vadd.f32 %v905, %v973
      %v1006 = vadd.f32 %v906, %v974
      %v1007 = vadd.f32 %v907, %v975
      %v1008 = vadd.f32 %v908, %v976
      %v1009 = vadd.f32 %v909, %v977
      %v1010 = vadd.f32 %v910, %v978
      %v1011 = vadd.f32 %v911, %v979
      %v1012 = vadd.f32 %v912, %v980
      %v1013 = vadd.f32 %v913, %v981
      %v1014 = vadd.f32 %v914, %v982
      %v1015 = vadd.f32 %v915, %v983
      %v1016 = vadd.f32 %v916, %v984
      %v1017 = vadd.f32 %v917, %v985
      %v1018 = vld [vmem:[%s644] sm:$0xff]
      %v1019 = vld [vmem:[%s644 + $0x8] sm:$0xff]
      %v1020 = vld [vmem:[%s644 + $0x18] sm:$0xff]
      %v1021 = vld [vmem:[%s644 + $0x20] sm:$0xff]
      %v1022 = vld [vmem:[%s644 + $0x30] sm:$0xff]
      %v1023 = vld [vmem:[%s644 + $0x38] sm:$0xff]
      %v1024 = vld [vmem:[%s644 + $0x48] sm:$0xff]
      %v1025 = vld [vmem:[%s644 + $0x50] sm:$0xff]
      %v1026 = vld [vmem:[%s644 + $0x60] sm:$0xff]
      %v1027 = vld [vmem:[%s644 + $0x68] sm:$0xff]
      %v1028 = vld [vmem:[%s644 + $0x78] sm:$0xff]
      %v1029 = vld [vmem:[%s644 + $0x80] sm:$0xff]
      %v1030 = vld [vmem:[%s644 + $0x90] sm:$0xff]
      %v1031 = vld [vmem:[%s644 + $0x98] sm:$0xff]
      %v1032 = vld [vmem:[%s644 + $0xa8] sm:$0xff]
      %v1033 = vld [vmem:[%s644 + $0xb0] sm:$0xff]
      %v1034 = vld [vmem:[%s644 + $0xc0] sm:$0xff]
      %v1035 = vld [vmem:[%s644 + $0xc8] sm:$0xff]
      %v1036 = vld [vmem:[%s644 + $0xd8] sm:$0xff]
      %v1037 = vld [vmem:[%s644 + $0xe0] sm:$0xff]
      %v1038 = vld [vmem:[%s644 + $0xf0] sm:$0xff]
      %v1039 = vld [vmem:[%s644 + $0xf8] sm:$0xff]
      %v1040 = vld [vmem:[%s644 + $0x108] sm:$0xff]
      %v1041 = vld [vmem:[%s644 + $0x110] sm:$0xff]
      %v1042 = vld [vmem:[%s644 + $0x120] sm:$0xff]
      %v1043 = vld [vmem:[%s644 + $0x128] sm:$0xff]
      %v1044 = vld [vmem:[%s644 + $0x138] sm:$0xff]
      %v1045 = vld [vmem:[%s644 + $0x140] sm:$0xff]
      %v1046 = vld [vmem:[%s644 + $0x150] sm:$0xff]
      %v1047 = vld [vmem:[%s644 + $0x158] sm:$0xff]
      %v1048 = vld [vmem:[%s644 + $0x168] sm:$0xff]
      %v1049 = vld [vmem:[%s644 + $0x170] sm:$0xff]
      %v1050 = vlaneseq
      %v1051 = vshrl.u32 %v1050, 7
      %v1052 = vsub.s32 3, %v1051
      %v1053 = vrot.slane %v716, %v1052
      %v1054 = vmul.f32 %v1018, %v1053
      %v1055 = vmul.f32 %v1019, %v1053
      %v1056 = vmul.f32 %v1020, %v1053
      %v1057 = vmul.f32 %v1021, %v1053
      %v1058 = vmul.f32 %v1022, %v1053
      %v1059 = vmul.f32 %v1023, %v1053
      %v1060 = vmul.f32 %v1024, %v1053
      %v1061 = vmul.f32 %v1025, %v1053
      %v1062 = vmul.f32 %v1026, %v1053
      %v1063 = vmul.f32 %v1027, %v1053
      %v1064 = vmul.f32 %v1028, %v1053
      %v1065 = vmul.f32 %v1029, %v1053
      %v1066 = vmul.f32 %v1030, %v1053
      %v1067 = vmul.f32 %v1031, %v1053
      %v1068 = vmul.f32 %v1032, %v1053
      %v1069 = vmul.f32 %v1033, %v1053
      %v1070 = vmul.f32 %v1034, %v1053
      %v1071 = vmul.f32 %v1035, %v1053
      %v1072 = vmul.f32 %v1036, %v1053
      %v1073 = vmul.f32 %v1037, %v1053
      %v1074 = vmul.f32 %v1038, %v1053
      %v1075 = vmul.f32 %v1039, %v1053
      %v1076 = vmul.f32 %v1040, %v1053
      %v1077 = vmul.f32 %v1041, %v1053
      %v1078 = vmul.f32 %v1042, %v1053
      %v1079 = vmul.f32 %v1043, %v1053
      %v1080 = vmul.f32 %v1044, %v1053
      %v1081 = vmul.f32 %v1045, %v1053
      %v1082 = vmul.f32 %v1046, %v1053
      %v1083 = vmul.f32 %v1047, %v1053
      %v1084 = vmul.f32 %v1048, %v1053
      %v1085 = vmul.f32 %v1049, %v1053
      %v1086 = vadd.f32 %v986, %v1054
      %v1087 = vadd.f32 %v987, %v1055
      %v1088 = vadd.f32 %v988, %v1056
      %v1089 = vadd.f32 %v989, %v1057
      %v1090 = vadd.f32 %v990, %v1058
      %v1091 = vadd.f32 %v991, %v1059
      %v1092 = vadd.f32 %v992, %v1060
      %v1093 = vadd.f32 %v993, %v1061
      %v1094 = vadd.f32 %v994, %v1062
      %v1095 = vadd.f32 %v995, %v1063
      %v1096 = vadd.f32 %v996, %v1064
      %v1097 = vadd.f32 %v997, %v1065
      %v1098 = vadd.f32 %v998, %v1066
      %v1099 = vadd.f32 %v999, %v1067
      %v1100 = vadd.f32 %v1000, %v1068
      %v1101 = vadd.f32 %v1001, %v1069
      %v1102 = vadd.f32 %v1002, %v1070
      %v1103 = vadd.f32 %v1003, %v1071
      %v1104 = vadd.f32 %v1004, %v1072
      %v1105 = vadd.f32 %v1005, %v1073
      %v1106 = vadd.f32 %v1006, %v1074
      %v1107 = vadd.f32 %v1007, %v1075
      %v1108 = vadd.f32 %v1008, %v1076
      %v1109 = vadd.f32 %v1009, %v1077
      %v1110 = vadd.f32 %v1010, %v1078
      %v1111 = vadd.f32 %v1011, %v1079
      %v1112 = vadd.f32 %v1012, %v1080
      %v1113 = vadd.f32 %v1013, %v1081
      %v1114 = vadd.f32 %v1014, %v1082
      %v1115 = vadd.f32 %v1015, %v1083
      %v1116 = vadd.f32 %v1016, %v1084
      %v1117 = vadd.f32 %v1017, %v1085
      %v1118 = vld [vmem:[%s644 + $0x1] sm:$0xff]
      %v1119 = vld [vmem:[%s644 + $0x9] sm:$0xff]
      %v1120 = vld [vmem:[%s644 + $0x19] sm:$0xff]
      %v1121 = vld [vmem:[%s644 + $0x21] sm:$0xff]
      %v1122 = vld [vmem:[%s644 + $0x31] sm:$0xff]
      %v1123 = vld [vmem:[%s644 + $0x39] sm:$0xff]
      %v1124 = vld [vmem:[%s644 + $0x49] sm:$0xff]
      %v1125 = vld [vmem:[%s644 + $0x51] sm:$0xff]
      %v1126 = vld [vmem:[%s644 + $0x61] sm:$0xff]
      %v1127 = vld [vmem:[%s644 + $0x69] sm:$0xff]
      %v1128 = vld [vmem:[%s644 + $0x79] sm:$0xff]
      %v1129 = vld [vmem:[%s644 + $0x81] sm:$0xff]
      %v1130 = vld [vmem:[%s644 + $0x91] sm:$0xff]
      %v1131 = vld [vmem:[%s644 + $0x99] sm:$0xff]
      %v1132 = vld [vmem:[%s644 + $0xa9] sm:$0xff]
      %v1133 = vld [vmem:[%s644 + $0xb1] sm:$0xff]
      %v1134 = vld [vmem:[%s644 + $0xc1] sm:$0xff]
      %v1135 = vld [vmem:[%s644 + $0xc9] sm:$0xff]
      %v1136 = vld [vmem:[%s644 + $0xd9] sm:$0xff]
      %v1137 = vld [vmem:[%s644 + $0xe1] sm:$0xff]
      %v1138 = vld [vmem:[%s644 + $0xf1] sm:$0xff]
      %v1139 = vld [vmem:[%s644 + $0xf9] sm:$0xff]
      %v1140 = vld [vmem:[%s644 + $0x109] sm:$0xff]
      %v1141 = vld [vmem:[%s644 + $0x111] sm:$0xff]
      %v1142 = vld [vmem:[%s644 + $0x121] sm:$0xff]
      %v1143 = vld [vmem:[%s644 + $0x129] sm:$0xff]
      %v1144 = vld [vmem:[%s644 + $0x139] sm:$0xff]
      %v1145 = vld [vmem:[%s644 + $0x141] sm:$0xff]
      %v1146 = vld [vmem:[%s644 + $0x151] sm:$0xff]
      %v1147 = vld [vmem:[%s644 + $0x159] sm:$0xff]
      %v1148 = vld [vmem:[%s644 + $0x169] sm:$0xff]
      %v1149 = vld [vmem:[%s644 + $0x171] sm:$0xff]
      %v1150 = vlaneseq
      %v1151 = vshrl.u32 %v1150, 7
      %v1152 = vsub.s32 4, %v1151
      %v1153 = vrot.slane %v716, %v1152
      %v1154 = vmul.f32 %v1118, %v1153
      %v1155 = vmul.f32 %v1119, %v1153
      %v1156 = vmul.f32 %v1120, %v1153
      %v1157 = vmul.f32 %v1121, %v1153
      %v1158 = vmul.f32 %v1122, %v1153
      %v1159 = vmul.f32 %v1123, %v1153
      %v1160 = vmul.f32 %v1124, %v1153
      %v1161 = vmul.f32 %v1125, %v1153
      %v1162 = vmul.f32 %v1126, %v1153
      %v1163 = vmul.f32 %v1127, %v1153
      %v1164 = vmul.f32 %v1128, %v1153
      %v1165 = vmul.f32 %v1129, %v1153
      %v1166 = vmul.f32 %v1130, %v1153
      %v1167 = vmul.f32 %v1131, %v1153
      %v1168 = vmul.f32 %v1132, %v1153
      %v1169 = vmul.f32 %v1133, %v1153
      %v1170 = vmul.f32 %v1134, %v1153
      %v1171 = vmul.f32 %v1135, %v1153
      %v1172 = vmul.f32 %v1136, %v1153
      %v1173 = vmul.f32 %v1137, %v1153
      %v1174 = vmul.f32 %v1138, %v1153
      %v1175 = vmul.f32 %v1139, %v1153
      %v1176 = vmul.f32 %v1140, %v1153
      %v1177 = vmul.f32 %v1141, %v1153
      %v1178 = vmul.f32 %v1142, %v1153
      %v1179 = vmul.f32 %v1143, %v1153
      %v1180 = vmul.f32 %v1144, %v1153
      %v1181 = vmul.f32 %v1145, %v1153
      %v1182 = vmul.f32 %v1146, %v1153
      %v1183 = vmul.f32 %v1147, %v1153
      %v1184 = vmul.f32 %v1148, %v1153
      %v1185 = vmul.f32 %v1149, %v1153
      %v1186 = vadd.f32 %v1086, %v1154
      %v1187 = vadd.f32 %v1087, %v1155
      %v1188 = vadd.f32 %v1088, %v1156
      %v1189 = vadd.f32 %v1089, %v1157
      %v1190 = vadd.f32 %v1090, %v1158
      %v1191 = vadd.f32 %v1091, %v1159
      %v1192 = vadd.f32 %v1092, %v1160
      %v1193 = vadd.f32 %v1093, %v1161
      %v1194 = vadd.f32 %v1094, %v1162
      %v1195 = vadd.f32 %v1095, %v1163
      %v1196 = vadd.f32 %v1096, %v1164
      %v1197 = vadd.f32 %v1097, %v1165
      %v1198 = vadd.f32 %v1098, %v1166
      %v1199 = vadd.f32 %v1099, %v1167
      %v1200 = vadd.f32 %v1100, %v1168
      %v1201 = vadd.f32 %v1101, %v1169
      %v1202 = vadd.f32 %v1102, %v1170
      %v1203 = vadd.f32 %v1103, %v1171
      %v1204 = vadd.f32 %v1104, %v1172
      %v1205 = vadd.f32 %v1105, %v1173
      %v1206 = vadd.f32 %v1106, %v1174
      %v1207 = vadd.f32 %v1107, %v1175
      %v1208 = vadd.f32 %v1108, %v1176
      %v1209 = vadd.f32 %v1109, %v1177
      %v1210 = vadd.f32 %v1110, %v1178
      %v1211 = vadd.f32 %v1111, %v1179
      %v1212 = vadd.f32 %v1112, %v1180
      %v1213 = vadd.f32 %v1113, %v1181
      %v1214 = vadd.f32 %v1114, %v1182
      %v1215 = vadd.f32 %v1115, %v1183
      %v1216 = vadd.f32 %v1116, %v1184
      %v1217 = vadd.f32 %v1117, %v1185
      %v1218 = vld [vmem:[%s644 + $0x2] sm:$0xff]
      %v1219 = vld [vmem:[%s644 + $0xa] sm:$0xff]
      %v1220 = vld [vmem:[%s644 + $0x1a] sm:$0xff]
      %v1221 = vld [vmem:[%s644 + $0x22] sm:$0xff]
      %v1222 = vld [vmem:[%s644 + $0x32] sm:$0xff]
      %v1223 = vld [vmem:[%s644 + $0x3a] sm:$0xff]
      %v1224 = vld [vmem:[%s644 + $0x4a] sm:$0xff]
      %v1225 = vld [vmem:[%s644 + $0x52] sm:$0xff]
      %v1226 = vld [vmem:[%s644 + $0x62] sm:$0xff]
      %v1227 = vld [vmem:[%s644 + $0x6a] sm:$0xff]
      %v1228 = vld [vmem:[%s644 + $0x7a] sm:$0xff]
      %v1229 = vld [vmem:[%s644 + $0x82] sm:$0xff]
      %v1230 = vld [vmem:[%s644 + $0x92] sm:$0xff]
      %v1231 = vld [vmem:[%s644 + $0x9a] sm:$0xff]
      %v1232 = vld [vmem:[%s644 + $0xaa] sm:$0xff]
      %v1233 = vld [vmem:[%s644 + $0xb2] sm:$0xff]
      %v1234 = vld [vmem:[%s644 + $0xc2] sm:$0xff]
      %v1235 = vld [vmem:[%s644 + $0xca] sm:$0xff]
      %v1236 = vld [vmem:[%s644 + $0xda] sm:$0xff]
      %v1237 = vld [vmem:[%s644 + $0xe2] sm:$0xff]
      %v1238 = vld [vmem:[%s644 + $0xf2] sm:$0xff]
      %v1239 = vld [vmem:[%s644 + $0xfa] sm:$0xff]
      %v1240 = vld [vmem:[%s644 + $0x10a] sm:$0xff]
      %v1241 = vld [vmem:[%s644 + $0x112] sm:$0xff]
      %v1242 = vld [vmem:[%s644 + $0x122] sm:$0xff]
      %v1243 = vld [vmem:[%s644 + $0x12a] sm:$0xff]
      %v1244 = vld [vmem:[%s644 + $0x13a] sm:$0xff]
      %v1245 = vld [vmem:[%s644 + $0x142] sm:$0xff]
      %v1246 = vld [vmem:[%s644 + $0x152] sm:$0xff]
      %v1247 = vld [vmem:[%s644 + $0x15a] sm:$0xff]
      %v1248 = vld [vmem:[%s644 + $0x16a] sm:$0xff]
      %v1249 = vld [vmem:[%s644 + $0x172] sm:$0xff]
      %v1250 = vlaneseq
      %v1251 = vshrl.u32 %v1250, 7
      %v1252 = vsub.s32 5, %v1251
      %v1253 = vrot.slane %v716, %v1252
      %v1254 = vmul.f32 %v1218, %v1253
      %v1255 = vmul.f32 %v1219, %v1253
      %v1256 = vmul.f32 %v1220, %v1253
      %v1257 = vmul.f32 %v1221, %v1253
      %v1258 = vmul.f32 %v1222, %v1253
      %v1259 = vmul.f32 %v1223, %v1253
      %v1260 = vmul.f32 %v1224, %v1253
      %v1261 = vmul.f32 %v1225, %v1253
      %v1262 = vmul.f32 %v1226, %v1253
      %v1263 = vmul.f32 %v1227, %v1253
      %v1264 = vmul.f32 %v1228, %v1253
      %v1265 = vmul.f32 %v1229, %v1253
      %v1266 = vmul.f32 %v1230, %v1253
      %v1267 = vmul.f32 %v1231, %v1253
      %v1268 = vmul.f32 %v1232, %v1253
      %v1269 = vmul.f32 %v1233, %v1253
      %v1270 = vmul.f32 %v1234, %v1253
      %v1271 = vmul.f32 %v1235, %v1253
      %v1272 = vmul.f32 %v1236, %v1253
      %v1273 = vmul.f32 %v1237, %v1253
      %v1274 = vmul.f32 %v1238, %v1253
      %v1275 = vmul.f32 %v1239, %v1253
      %v1276 = vmul.f32 %v1240, %v1253
      %v1277 = vmul.f32 %v1241, %v1253
      %v1278 = vmul.f32 %v1242, %v1253
      %v1279 = vmul.f32 %v1243, %v1253
      %v1280 = vmul.f32 %v1244, %v1253
      %v1281 = vmul.f32 %v1245, %v1253
      %v1282 = vmul.f32 %v1246, %v1253
      %v1283 = vmul.f32 %v1247, %v1253
      %v1284 = vmul.f32 %v1248, %v1253
      %v1285 = vmul.f32 %v1249, %v1253
      %v1286 = vadd.f32 %v1186, %v1254
      %v1287 = vadd.f32 %v1187, %v1255
      %v1288 = vadd.f32 %v1188, %v1256
      %v1289 = vadd.f32 %v1189, %v1257
      %v1290 = vadd.f32 %v1190, %v1258
      %v1291 = vadd.f32 %v1191, %v1259
      %v1292 = vadd.f32 %v1192, %v1260
      %v1293 = vadd.f32 %v1193, %v1261
      %v1294 = vadd.f32 %v1194, %v1262
      %v1295 = vadd.f32 %v1195, %v1263
      %v1296 = vadd.f32 %v1196, %v1264
      %v1297 = vadd.f32 %v1197, %v1265
      %v1298 = vadd.f32 %v1198, %v1266
      %v1299 = vadd.f32 %v1199, %v1267
      %v1300 = vadd.f32 %v1200, %v1268
      %v1301 = vadd.f32 %v1201, %v1269
      %v1302 = vadd.f32 %v1202, %v1270
      %v1303 = vadd.f32 %v1203, %v1271
      %v1304 = vadd.f32 %v1204, %v1272
      %v1305 = vadd.f32 %v1205, %v1273
      %v1306 = vadd.f32 %v1206, %v1274
      %v1307 = vadd.f32 %v1207, %v1275
      %v1308 = vadd.f32 %v1208, %v1276
      %v1309 = vadd.f32 %v1209, %v1277
      %v1310 = vadd.f32 %v1210, %v1278
      %v1311 = vadd.f32 %v1211, %v1279
      %v1312 = vadd.f32 %v1212, %v1280
      %v1313 = vadd.f32 %v1213, %v1281
      %v1314 = vadd.f32 %v1214, %v1282
      %v1315 = vadd.f32 %v1215, %v1283
      %v1316 = vadd.f32 %v1216, %v1284
      %v1317 = vadd.f32 %v1217, %v1285
      %s1318 = scalar_lea.vmem [#allocation2], 48
      %v1319 = vld [vmem:[%s1318] sm:$0xff]
      %v1320 = vld [vmem:[%s1318 + $0x8] sm:$0xff]
      %v1321 = vld [vmem:[%s1318 + $0x18] sm:$0xff]
      %v1322 = vld [vmem:[%s1318 + $0x20] sm:$0xff]
      %v1323 = vld [vmem:[%s1318 + $0x30] sm:$0xff]
      %v1324 = vld [vmem:[%s1318 + $0x38] sm:$0xff]
      %v1325 = vld [vmem:[%s1318 + $0x48] sm:$0xff]
      %v1326 = vld [vmem:[%s1318 + $0x50] sm:$0xff]
      %v1327 = vld [vmem:[%s1318 + $0x60] sm:$0xff]
      %v1328 = vld [vmem:[%s1318 + $0x68] sm:$0xff]
      %v1329 = vld [vmem:[%s1318 + $0x78] sm:$0xff]
      %v1330 = vld [vmem:[%s1318 + $0x80] sm:$0xff]
      %v1331 = vld [vmem:[%s1318 + $0x90] sm:$0xff]
      %v1332 = vld [vmem:[%s1318 + $0x98] sm:$0xff]
      %v1333 = vld [vmem:[%s1318 + $0xa8] sm:$0xff]
      %v1334 = vld [vmem:[%s1318 + $0xb0] sm:$0xff]
      %v1335 = vld [vmem:[%s1318 + $0xc0] sm:$0xff]
      %v1336 = vld [vmem:[%s1318 + $0xc8] sm:$0xff]
      %v1337 = vld [vmem:[%s1318 + $0xd8] sm:$0xff]
      %v1338 = vld [vmem:[%s1318 + $0xe0] sm:$0xff]
      %v1339 = vld [vmem:[%s1318 + $0xf0] sm:$0xff]
      %v1340 = vld [vmem:[%s1318 + $0xf8] sm:$0xff]
      %v1341 = vld [vmem:[%s1318 + $0x108] sm:$0xff]
      %v1342 = vld [vmem:[%s1318 + $0x110] sm:$0xff]
      %v1343 = vld [vmem:[%s1318 + $0x120] sm:$0xff]
      %v1344 = vld [vmem:[%s1318 + $0x128] sm:$0xff]
      %v1345 = vld [vmem:[%s1318 + $0x138] sm:$0xff]
      %v1346 = vld [vmem:[%s1318 + $0x140] sm:$0xff]
      %v1347 = vld [vmem:[%s1318 + $0x150] sm:$0xff]
      %v1348 = vld [vmem:[%s1318 + $0x158] sm:$0xff]
      %v1349 = vld [vmem:[%s1318 + $0x168] sm:$0xff]
      %v1350 = vld [vmem:[%s1318 + $0x170] sm:$0xff]
      %v1351 = vlaneseq
      %v1352 = vshrl.u32 %v1351, 7
      %v1353 = vsub.s32 6, %v1352
      %v1354 = vrot.slane %v716, %v1353
      %v1355 = vmul.f32 %v1319, %v1354
      %v1356 = vmul.f32 %v1320, %v1354
      %v1357 = vmul.f32 %v1321, %v1354
      %v1358 = vmul.f32 %v1322, %v1354
      %v1359 = vmul.f32 %v1323, %v1354
      %v1360 = vmul.f32 %v1324, %v1354
      %v1361 = vmul.f32 %v1325, %v1354
      %v1362 = vmul.f32 %v1326, %v1354
      %v1363 = vmul.f32 %v1327, %v1354
      %v1364 = vmul.f32 %v1328, %v1354
      %v1365 = vmul.f32 %v1329, %v1354
      %v1366 = vmul.f32 %v1330, %v1354
      %v1367 = vmul.f32 %v1331, %v1354
      %v1368 = vmul.f32 %v1332, %v1354
      %v1369 = vmul.f32 %v1333, %v1354
      %v1370 = vmul.f32 %v1334, %v1354
      %v1371 = vmul.f32 %v1335, %v1354
      %v1372 = vmul.f32 %v1336, %v1354
      %v1373 = vmul.f32 %v1337, %v1354
      %v1374 = vmul.f32 %v1338, %v1354
      %v1375 = vmul.f32 %v1339, %v1354
      %v1376 = vmul.f32 %v1340, %v1354
      %v1377 = vmul.f32 %v1341, %v1354
      %v1378 = vmul.f32 %v1342, %v1354
      %v1379 = vmul.f32 %v1343, %v1354
      %v1380 = vmul.f32 %v1344, %v1354
      %v1381 = vmul.f32 %v1345, %v1354
      %v1382 = vmul.f32 %v1346, %v1354
      %v1383 = vmul.f32 %v1347, %v1354
      %v1384 = vmul.f32 %v1348, %v1354
      %v1385 = vmul.f32 %v1349, %v1354
      %v1386 = vmul.f32 %v1350, %v1354
      %v1387 = vadd.f32 %v1286, %v1355
      %v1388 = vadd.f32 %v1287, %v1356
      %v1389 = vadd.f32 %v1288, %v1357
      %v1390 = vadd.f32 %v1289, %v1358
      %v1391 = vadd.f32 %v1290, %v1359
      %v1392 = vadd.f32 %v1291, %v1360
      %v1393 = vadd.f32 %v1292, %v1361
      %v1394 = vadd.f32 %v1293, %v1362
      %v1395 = vadd.f32 %v1294, %v1363
      %v1396 = vadd.f32 %v1295, %v1364
      %v1397 = vadd.f32 %v1296, %v1365
      %v1398 = vadd.f32 %v1297, %v1366
      %v1399 = vadd.f32 %v1298, %v1367
      %v1400 = vadd.f32 %v1299, %v1368
      %v1401 = vadd.f32 %v1300, %v1369
      %v1402 = vadd.f32 %v1301, %v1370
      %v1403 = vadd.f32 %v1302, %v1371
      %v1404 = vadd.f32 %v1303, %v1372
      %v1405 = vadd.f32 %v1304, %v1373
      %v1406 = vadd.f32 %v1305, %v1374
      %v1407 = vadd.f32 %v1306, %v1375
      %v1408 = vadd.f32 %v1307, %v1376
      %v1409 = vadd.f32 %v1308, %v1377
      %v1410 = vadd.f32 %v1309, %v1378
      %v1411 = vadd.f32 %v1310, %v1379
      %v1412 = vadd.f32 %v1311, %v1380
      %v1413 = vadd.f32 %v1312, %v1381
      %v1414 = vadd.f32 %v1313, %v1382
      %v1415 = vadd.f32 %v1314, %v1383
      %v1416 = vadd.f32 %v1315, %v1384
      %v1417 = vadd.f32 %v1316, %v1385
      %v1418 = vadd.f32 %v1317, %v1386
      %v1419 = vld [vmem:[%s1318 + $0x1] sm:$0xff]
      %v1420 = vld [vmem:[%s1318 + $0x9] sm:$0xff]
      %v1421 = vld [vmem:[%s1318 + $0x19] sm:$0xff]
      %v1422 = vld [vmem:[%s1318 + $0x21] sm:$0xff]
      %v1423 = vld [vmem:[%s1318 + $0x31] sm:$0xff]
      %v1424 = vld [vmem:[%s1318 + $0x39] sm:$0xff]
      %v1425 = vld [vmem:[%s1318 + $0x49] sm:$0xff]
      %v1426 = vld [vmem:[%s1318 + $0x51] sm:$0xff]
      %v1427 = vld [vmem:[%s1318 + $0x61] sm:$0xff]
      %v1428 = vld [vmem:[%s1318 + $0x69] sm:$0xff]
      %v1429 = vld [vmem:[%s1318 + $0x79] sm:$0xff]
      %v1430 = vld [vmem:[%s1318 + $0x81] sm:$0xff]
      %v1431 = vld [vmem:[%s1318 + $0x91] sm:$0xff]
      %v1432 = vld [vmem:[%s1318 + $0x99] sm:$0xff]
      %v1433 = vld [vmem:[%s1318 + $0xa9] sm:$0xff]
      %v1434 = vld [vmem:[%s1318 + $0xb1] sm:$0xff]
      %v1435 = vld [vmem:[%s1318 + $0xc1] sm:$0xff]
      %v1436 = vld [vmem:[%s1318 + $0xc9] sm:$0xff]
      %v1437 = vld [vmem:[%s1318 + $0xd9] sm:$0xff]
      %v1438 = vld [vmem:[%s1318 + $0xe1] sm:$0xff]
      %v1439 = vld [vmem:[%s1318 + $0xf1] sm:$0xff]
      %v1440 = vld [vmem:[%s1318 + $0xf9] sm:$0xff]
      %v1441 = vld [vmem:[%s1318 + $0x109] sm:$0xff]
      %v1442 = vld [vmem:[%s1318 + $0x111] sm:$0xff]
      %v1443 = vld [vmem:[%s1318 + $0x121] sm:$0xff]
      %v1444 = vld [vmem:[%s1318 + $0x129] sm:$0xff]
      %v1445 = vld [vmem:[%s1318 + $0x139] sm:$0xff]
      %v1446 = vld [vmem:[%s1318 + $0x141] sm:$0xff]
      %v1447 = vld [vmem:[%s1318 + $0x151] sm:$0xff]
      %v1448 = vld [vmem:[%s1318 + $0x159] sm:$0xff]
      %v1449 = vld [vmem:[%s1318 + $0x169] sm:$0xff]
      %v1450 = vld [vmem:[%s1318 + $0x171] sm:$0xff]
      %v1451 = vlaneseq
      %v1452 = vshrl.u32 %v1451, 7
      %v1453 = vsub.s32 7, %v1452
      %v1454 = vrot.slane %v716, %v1453
      %v1455 = vmul.f32 %v1419, %v1454
      %v1456 = vmul.f32 %v1420, %v1454
      %v1457 = vmul.f32 %v1421, %v1454
      %v1458 = vmul.f32 %v1422, %v1454
      %v1459 = vmul.f32 %v1423, %v1454
      %v1460 = vmul.f32 %v1424, %v1454
      %v1461 = vmul.f32 %v1425, %v1454
      %v1462 = vmul.f32 %v1426, %v1454
      %v1463 = vmul.f32 %v1427, %v1454
      %v1464 = vmul.f32 %v1428, %v1454
      %v1465 = vmul.f32 %v1429, %v1454
      %v1466 = vmul.f32 %v1430, %v1454
      %v1467 = vmul.f32 %v1431, %v1454
      %v1468 = vmul.f32 %v1432, %v1454
      %v1469 = vmul.f32 %v1433, %v1454
      %v1470 = vmul.f32 %v1434, %v1454
      %v1471 = vmul.f32 %v1435, %v1454
      %v1472 = vmul.f32 %v1436, %v1454
      %v1473 = vmul.f32 %v1437, %v1454
      %v1474 = vmul.f32 %v1438, %v1454
      %v1475 = vmul.f32 %v1439, %v1454
      %v1476 = vmul.f32 %v1440, %v1454
      %v1477 = vmul.f32 %v1441, %v1454
      %v1478 = vmul.f32 %v1442, %v1454
      %v1479 = vmul.f32 %v1443, %v1454
      %v1480 = vmul.f32 %v1444, %v1454
      %v1481 = vmul.f32 %v1445, %v1454
      %v1482 = vmul.f32 %v1446, %v1454
      %v1483 = vmul.f32 %v1447, %v1454
      %v1484 = vmul.f32 %v1448, %v1454
      %v1485 = vmul.f32 %v1449, %v1454
      %v1486 = vmul.f32 %v1450, %v1454
      %v1487 = vadd.f32 %v1387, %v1455
      %v1488 = vadd.f32 %v1388, %v1456
      %v1489 = vadd.f32 %v1389, %v1457
      %v1490 = vadd.f32 %v1390, %v1458
      %v1491 = vadd.f32 %v1391, %v1459
      %v1492 = vadd.f32 %v1392, %v1460
      %v1493 = vadd.f32 %v1393, %v1461
      %v1494 = vadd.f32 %v1394, %v1462
      %v1495 = vadd.f32 %v1395, %v1463
      %v1496 = vadd.f32 %v1396, %v1464
      %v1497 = vadd.f32 %v1397, %v1465
      %v1498 = vadd.f32 %v1398, %v1466
      %v1499 = vadd.f32 %v1399, %v1467
      %v1500 = vadd.f32 %v1400, %v1468
      %v1501 = vadd.f32 %v1401, %v1469
      %v1502 = vadd.f32 %v1402, %v1470
      %v1503 = vadd.f32 %v1403, %v1471
      %v1504 = vadd.f32 %v1404, %v1472
      %v1505 = vadd.f32 %v1405, %v1473
      %v1506 = vadd.f32 %v1406, %v1474
      %v1507 = vadd.f32 %v1407, %v1475
      %v1508 = vadd.f32 %v1408, %v1476
      %v1509 = vadd.f32 %v1409, %v1477
      %v1510 = vadd.f32 %v1410, %v1478
      %v1511 = vadd.f32 %v1411, %v1479
      %v1512 = vadd.f32 %v1412, %v1480
      %v1513 = vadd.f32 %v1413, %v1481
      %v1514 = vadd.f32 %v1414, %v1482
      %v1515 = vadd.f32 %v1415, %v1483
      %v1516 = vadd.f32 %v1416, %v1484
      %v1517 = vadd.f32 %v1417, %v1485
      %v1518 = vadd.f32 %v1418, %v1486
      %v1519 = vld [vmem:[%s1318 + $0x2] sm:$0xff]
      %v1520 = vld [vmem:[%s1318 + $0xa] sm:$0xff]
      %v1521 = vld [vmem:[%s1318 + $0x1a] sm:$0xff]
      %v1522 = vld [vmem:[%s1318 + $0x22] sm:$0xff]
      %v1523 = vld [vmem:[%s1318 + $0x32] sm:$0xff]
      %v1524 = vld [vmem:[%s1318 + $0x3a] sm:$0xff]
      %v1525 = vld [vmem:[%s1318 + $0x4a] sm:$0xff]
      %v1526 = vld [vmem:[%s1318 + $0x52] sm:$0xff]
      %v1527 = vld [vmem:[%s1318 + $0x62] sm:$0xff]
      %v1528 = vld [vmem:[%s1318 + $0x6a] sm:$0xff]
      %v1529 = vld [vmem:[%s1318 + $0x7a] sm:$0xff]
      %v1530 = vld [vmem:[%s1318 + $0x82] sm:$0xff]
      %v1531 = vld [vmem:[%s1318 + $0x92] sm:$0xff]
      %v1532 = vld [vmem:[%s1318 + $0x9a] sm:$0xff]
      %v1533 = vld [vmem:[%s1318 + $0xaa] sm:$0xff]
      %v1534 = vld [vmem:[%s1318 + $0xb2] sm:$0xff]
      %v1535 = vld [vmem:[%s1318 + $0xc2] sm:$0xff]
      %v1536 = vld [vmem:[%s1318 + $0xca] sm:$0xff]
      %v1537 = vld [vmem:[%s1318 + $0xda] sm:$0xff]
      %v1538 = vld [vmem:[%s1318 + $0xe2] sm:$0xff]
      %v1539 = vld [vmem:[%s1318 + $0xf2] sm:$0xff]
      %v1540 = vld [vmem:[%s1318 + $0xfa] sm:$0xff]
      %v1541 = vld [vmem:[%s1318 + $0x10a] sm:$0xff]
      %v1542 = vld [vmem:[%s1318 + $0x112] sm:$0xff]
      %v1543 = vld [vmem:[%s1318 + $0x122] sm:$0xff]
      %v1544 = vld [vmem:[%s1318 + $0x12a] sm:$0xff]
      %v1545 = vld [vmem:[%s1318 + $0x13a] sm:$0xff]
      %v1546 = vld [vmem:[%s1318 + $0x142] sm:$0xff]
      %v1547 = vld [vmem:[%s1318 + $0x152] sm:$0xff]
      %v1548 = vld [vmem:[%s1318 + $0x15a] sm:$0xff]
      %v1549 = vld [vmem:[%s1318 + $0x16a] sm:$0xff]
      %v1550 = vld [vmem:[%s1318 + $0x172] sm:$0xff]
      %v1551 = vlaneseq
      %v1552 = vshrl.u32 %v1551, 7
      %v1553 = vsub.s32 0, %v1552
      %v1554 = vrot.slane %v717, %v1553
      %v1555 = vmul.f32 %v1519, %v1554
      %v1556 = vmul.f32 %v1520, %v1554
      %v1557 = vmul.f32 %v1521, %v1554
      %v1558 = vmul.f32 %v1522, %v1554
      %v1559 = vmul.f32 %v1523, %v1554
      %v1560 = vmul.f32 %v1524, %v1554
      %v1561 = vmul.f32 %v1525, %v1554
      %v1562 = vmul.f32 %v1526, %v1554
      %v1563 = vmul.f32 %v1527, %v1554
      %v1564 = vmul.f32 %v1528, %v1554
      %v1565 = vmul.f32 %v1529, %v1554
      %v1566 = vmul.f32 %v1530, %v1554
      %v1567 = vmul.f32 %v1531, %v1554
      %v1568 = vmul.f32 %v1532, %v1554
      %v1569 = vmul.f32 %v1533, %v1554
      %v1570 = vmul.f32 %v1534, %v1554
      %v1571 = vmul.f32 %v1535, %v1554
      %v1572 = vmul.f32 %v1536, %v1554
      %v1573 = vmul.f32 %v1537, %v1554
      %v1574 = vmul.f32 %v1538, %v1554
      %v1575 = vmul.f32 %v1539, %v1554
      %v1576 = vmul.f32 %v1540, %v1554
      %v1577 = vmul.f32 %v1541, %v1554
      %v1578 = vmul.f32 %v1542, %v1554
      %v1579 = vmul.f32 %v1543, %v1554
      %v1580 = vmul.f32 %v1544, %v1554
      %v1581 = vmul.f32 %v1545, %v1554
      %v1582 = vmul.f32 %v1546, %v1554
      %v1583 = vmul.f32 %v1547, %v1554
      %v1584 = vmul.f32 %v1548, %v1554
      %v1585 = vmul.f32 %v1549, %v1554
      %v1586 = vmul.f32 %v1550, %v1554
      %v1587 = vadd.f32 %v1487, %v1555
      %v1588 = vadd.f32 %v1488, %v1556
      %v1589 = vadd.f32 %v1489, %v1557
      %v1590 = vadd.f32 %v1490, %v1558
      %v1591 = vadd.f32 %v1491, %v1559
      %v1592 = vadd.f32 %v1492, %v1560
      %v1593 = vadd.f32 %v1493, %v1561
      %v1594 = vadd.f32 %v1494, %v1562
      %v1595 = vadd.f32 %v1495, %v1563
      %v1596 = vadd.f32 %v1496, %v1564
      %v1597 = vadd.f32 %v1497, %v1565
      %v1598 = vadd.f32 %v1498, %v1566
      %v1599 = vadd.f32 %v1499, %v1567
      %v1600 = vadd.f32 %v1500, %v1568
      %v1601 = vadd.f32 %v1501, %v1569
      %v1602 = vadd.f32 %v1502, %v1570
      %v1603 = vadd.f32 %v1503, %v1571
      %v1604 = vadd.f32 %v1504, %v1572
      %v1605 = vadd.f32 %v1505, %v1573
      %v1606 = vadd.f32 %v1506, %v1574
      %v1607 = vadd.f32 %v1507, %v1575
      %v1608 = vadd.f32 %v1508, %v1576
      %v1609 = vadd.f32 %v1509, %v1577
      %v1610 = vadd.f32 %v1510, %v1578
      %v1611 = vadd.f32 %v1511, %v1579
      %v1612 = vadd.f32 %v1512, %v1580
      %v1613 = vadd.f32 %v1513, %v1581
      %v1614 = vadd.f32 %v1514, %v1582
      %v1615 = vadd.f32 %v1515, %v1583
      %v1616 = vadd.f32 %v1516, %v1584
      %v1617 = vadd.f32 %v1517, %v1585
      %v1618 = vadd.f32 %v1518, %v1586
      %v1619 = vld [vmem:[%s4] sm:$0x1]
      %v1621 = vlaneseq
      %v1622 = vshrl.u32 %v1621, 7
      %v1623 = vsub.s32 0, %v1622
      %v1624 = vrot.slane %v1619, %v1623
      %v1626 = vadd.f32 %v1587, %v1624
      %v1627 = vadd.f32 %v1588, %v1624
      %v1628 = vadd.f32 %v1589, %v1624
      %v1629 = vadd.f32 %v1590, %v1624
      %v1630 = vadd.f32 %v1591, %v1624
      %v1631 = vadd.f32 %v1592, %v1624
      %v1632 = vadd.f32 %v1593, %v1624
      %v1633 = vadd.f32 %v1594, %v1624
      %v1634 = vadd.f32 %v1595, %v1624
      %v1635 = vadd.f32 %v1596, %v1624
      %v1636 = vadd.f32 %v1597, %v1624
      %v1637 = vadd.f32 %v1598, %v1624
      %v1638 = vadd.f32 %v1599, %v1624
      %v1639 = vadd.f32 %v1600, %v1624
      %v1640 = vadd.f32 %v1601, %v1624
      %v1641 = vadd.f32 %v1602, %v1624
      %v1642 = vadd.f32 %v1603, %v1624
      %v1643 = vadd.f32 %v1604, %v1624
      %v1644 = vadd.f32 %v1605, %v1624
      %v1645 = vadd.f32 %v1606, %v1624
      %v1646 = vadd.f32 %v1607, %v1624
      %v1647 = vadd.f32 %v1608, %v1624
      %v1648 = vadd.f32 %v1609, %v1624
      %v1649 = vadd.f32 %v1610, %v1624
      %v1650 = vadd.f32 %v1611, %v1624
      %v1651 = vadd.f32 %v1612, %v1624
      %v1652 = vadd.f32 %v1613, %v1624
      %v1653 = vadd.f32 %v1614, %v1624
      %v1654 = vadd.f32 %v1615, %v1624
      %v1655 = vadd.f32 %v1616, %v1624
      %v1656 = vadd.f32 %v1617, %v1624
      %v1657 = vadd.f32 %v1618, %v1624
      %v1658 = vmul.f32 %v1626, 0.5
      %v1659 = vmul.f32 %v1627, 0.5
      %v1660 = vmul.f32 %v1628, 0.5
      %v1661 = vmul.f32 %v1629, 0.5
      %v1662 = vmul.f32 %v1630, 0.5
      %v1663 = vmul.f32 %v1631, 0.5
      %v1664 = vmul.f32 %v1632, 0.5
      %v1665 = vmul.f32 %v1633, 0.5
      %v1666 = vmul.f32 %v1634, 0.5
      %v1667 = vmul.f32 %v1635, 0.5
      %v1668 = vmul.f32 %v1636, 0.5
      %v1669 = vmul.f32 %v1637, 0.5
      %v1670 = vmul.f32 %v1638, 0.5
      %v1671 = vmul.f32 %v1639, 0.5
      %v1672 = vmul.f32 %v1640, 0.5
      %v1673 = vmul.f32 %v1641, 0.5
      %v1674 = vmul.f32 %v1642, 0.5
      %v1675 = vmul.f32 %v1643, 0.5
      %v1676 = vmul.f32 %v1644, 0.5
      %v1677 = vmul.f32 %v1645, 0.5
      %v1678 = vmul.f32 %v1646, 0.5
      %v1679 = vmul.f32 %v1647, 0.5
      %v1680 = vmul.f32 %v1648, 0.5
      %v1681 = vmul.f32 %v1649, 0.5
      %v1682 = vmul.f32 %v1650, 0.5
      %v1683 = vmul.f32 %v1651, 0.5
      %v1684 = vmul.f32 %v1652, 0.5
      %v1685 = vmul.f32 %v1653, 0.5
      %v1686 = vmul.f32 %v1654, 0.5
      %v1687 = vmul.f32 %v1655, 0.5
      %v1688 = vmul.f32 %v1656, 0.5
      %v1689 = vmul.f32 %v1657, 0.5
      %v1690 = vmul.f32 %v1626, %v1626
      %v1691 = vmul.f32 %v1627, %v1627
      %v1692 = vmul.f32 %v1628, %v1628
      %v1693 = vmul.f32 %v1629, %v1629
      %v1694 = vmul.f32 %v1630, %v1630
      %v1695 = vmul.f32 %v1631, %v1631
      %v1696 = vmul.f32 %v1632, %v1632
      %v1697 = vmul.f32 %v1633, %v1633
      %v1698 = vmul.f32 %v1634, %v1634
      %v1699 = vmul.f32 %v1635, %v1635
      %v1700 = vmul.f32 %v1636, %v1636
      %v1701 = vmul.f32 %v1637, %v1637
      %v1702 = vmul.f32 %v1638, %v1638
      %v1703 = vmul.f32 %v1639, %v1639
      %v1704 = vmul.f32 %v1640, %v1640
      %v1705 = vmul.f32 %v1641, %v1641
      %v1706 = vmul.f32 %v1642, %v1642
      %v1707 = vmul.f32 %v1643, %v1643
      %v1708 = vmul.f32 %v1644, %v1644
      %v1709 = vmul.f32 %v1645, %v1645
      %v1710 = vmul.f32 %v1646, %v1646
      %v1711 = vmul.f32 %v1647, %v1647
      %v1712 = vmul.f32 %v1648, %v1648
      %v1713 = vmul.f32 %v1649, %v1649
      %v1714 = vmul.f32 %v1650, %v1650
      %v1715 = vmul.f32 %v1651, %v1651
      %v1716 = vmul.f32 %v1652, %v1652
      %v1717 = vmul.f32 %v1653, %v1653
      %v1718 = vmul.f32 %v1654, %v1654
      %v1719 = vmul.f32 %v1655, %v1655
      %v1720 = vmul.f32 %v1656, %v1656
      %v1721 = vmul.f32 %v1657, %v1657
      %v1722 = vmul.f32 %v1690, %v1626
      %v1723 = vmul.f32 %v1691, %v1627
      %v1724 = vmul.f32 %v1692, %v1628
      %v1725 = vmul.f32 %v1693, %v1629
      %v1726 = vmul.f32 %v1694, %v1630
      %v1727 = vmul.f32 %v1695, %v1631
      %v1728 = vmul.f32 %v1696, %v1632
      %v1729 = vmul.f32 %v1697, %v1633
      %v1730 = vmul.f32 %v1698, %v1634
      %v1731 = vmul.f32 %v1699, %v1635
      %v1732 = vmul.f32 %v1700, %v1636
      %v1733 = vmul.f32 %v1701, %v1637
      %v1734 = vmul.f32 %v1702, %v1638
      %v1735 = vmul.f32 %v1703, %v1639
      %v1736 = vmul.f32 %v1704, %v1640
      %v1737 = vmul.f32 %v1705, %v1641
      %v1738 = vmul.f32 %v1706, %v1642
      %v1739 = vmul.f32 %v1707, %v1643
      %v1740 = vmul.f32 %v1708, %v1644
      %v1741 = vmul.f32 %v1709, %v1645
      %v1742 = vmul.f32 %v1710, %v1646
      %v1743 = vmul.f32 %v1711, %v1647
      %v1744 = vmul.f32 %v1712, %v1648
      %v1745 = vmul.f32 %v1713, %v1649
      %v1746 = vmul.f32 %v1714, %v1650
      %v1747 = vmul.f32 %v1715, %v1651
      %v1748 = vmul.f32 %v1716, %v1652
      %v1749 = vmul.f32 %v1717, %v1653
      %v1750 = vmul.f32 %v1718, %v1654
      %v1751 = vmul.f32 %v1719, %v1655
      %v1752 = vmul.f32 %v1720, %v1656
      %v1753 = vmul.f32 %v1721, %v1657
      %v1754 = vmul.f32 %v1722, 0.044715
      %v1755 = vmul.f32 %v1723, 0.044715
      %v1756 = vmul.f32 %v1724, 0.044715
      %v1757 = vmul.f32 %v1725, 0.044715
      %v1758 = vmul.f32 %v1726, 0.044715
      %v1759 = vmul.f32 %v1727, 0.044715
      %v1760 = vmul.f32 %v1728, 0.044715
      %v1761 = vmul.f32 %v1729, 0.044715
      %v1762 = vmul.f32 %v1730, 0.044715
      %v1763 = vmul.f32 %v1731, 0.044715
      %v1764 = vmul.f32 %v1732, 0.044715
      %v1765 = vmul.f32 %v1733, 0.044715
      %v1766 = vmul.f32 %v1734, 0.044715
      %v1767 = vmul.f32 %v1735, 0.044715
      %v1768 = vmul.f32 %v1736, 0.044715
      %v1769 = vmul.f32 %v1737, 0.044715
      %v1770 = vmul.f32 %v1738, 0.044715
      %v1771 = vmul.f32 %v1739, 0.044715
      %v1772 = vmul.f32 %v1740, 0.044715
      %v1773 = vmul.f32 %v1741, 0.044715
      %v1774 = vmul.f32 %v1742, 0.044715
      %v1775 = vmul.f32 %v1743, 0.044715
      %v1776 = vmul.f32 %v1744, 0.044715
      %v1777 = vmul.f32 %v1745, 0.044715
      %v1778 = vmul.f32 %v1746, 0.044715
      %v1779 = vmul.f32 %v1747, 0.044715
      %v1780 = vmul.f32 %v1748, 0.044715
      %v1781 = vmul.f32 %v1749, 0.044715
      %v1782 = vmul.f32 %v1750, 0.044715
      %v1783 = vmul.f32 %v1751, 0.044715
      %v1784 = vmul.f32 %v1752, 0.044715
      %v1785 = vmul.f32 %v1753, 0.044715
      %v1786 = vadd.f32 %v1626, %v1754
      %v1787 = vadd.f32 %v1627, %v1755
      %v1788 = vadd.f32 %v1628, %v1756
      %v1789 = vadd.f32 %v1629, %v1757
      %v1790 = vadd.f32 %v1630, %v1758
      %v1791 = vadd.f32 %v1631, %v1759
      %v1792 = vadd.f32 %v1632, %v1760
      %v1793 = vadd.f32 %v1633, %v1761
      %v1794 = vadd.f32 %v1634, %v1762
      %v1795 = vadd.f32 %v1635, %v1763
      %v1796 = vadd.f32 %v1636, %v1764
      %v1797 = vadd.f32 %v1637, %v1765
      %v1798 = vadd.f32 %v1638, %v1766
      %v1799 = vadd.f32 %v1639, %v1767
      %v1800 = vadd.f32 %v1640, %v1768
      %v1801 = vadd.f32 %v1641, %v1769
      %v1802 = vadd.f32 %v1642, %v1770
      %v1803 = vadd.f32 %v1643, %v1771
      %v1804 = vadd.f32 %v1644, %v1772
      %v1805 = vadd.f32 %v1645, %v1773
      %v1806 = vadd.f32 %v1646, %v1774
      %v1807 = vadd.f32 %v1647, %v1775
      %v1808 = vadd.f32 %v1648, %v1776
      %v1809 = vadd.f32 %v1649, %v1777
      %v1810 = vadd.f32 %v1650, %v1778
      %v1811 = vadd.f32 %v1651, %v1779
      %v1812 = vadd.f32 %v1652, %v1780
      %v1813 = vadd.f32 %v1653, %v1781
      %v1814 = vadd.f32 %v1654, %v1782
      %v1815 = vadd.f32 %v1655, %v1783
      %v1816 = vadd.f32 %v1656, %v1784
      %v1817 = vadd.f32 %v1657, %v1785
      %v1818 = vmul.f32 %v1786, 0.7978846
      %v1819 = vmul.f32 %v1787, 0.7978846
      %v1820 = vmul.f32 %v1788, 0.7978846
      %v1821 = vmul.f32 %v1789, 0.7978846
      %v1822 = vmul.f32 %v1790, 0.7978846
      %v1823 = vmul.f32 %v1791, 0.7978846
      %v1824 = vmul.f32 %v1792, 0.7978846
      %v1825 = vmul.f32 %v1793, 0.7978846
      %v1826 = vmul.f32 %v1794, 0.7978846
      %v1827 = vmul.f32 %v1795, 0.7978846
      %v1828 = vmul.f32 %v1796, 0.7978846
      %v1829 = vmul.f32 %v1797, 0.7978846
      %v1830 = vmul.f32 %v1798, 0.7978846
      %v1831 = vmul.f32 %v1799, 0.7978846
      %v1832 = vmul.f32 %v1800, 0.7978846
      %v1833 = vmul.f32 %v1801, 0.7978846
      %v1834 = vmul.f32 %v1802, 0.7978846
      %v1835 = vmul.f32 %v1803, 0.7978846
      %v1836 = vmul.f32 %v1804, 0.7978846
      %v1837 = vmul.f32 %v1805, 0.7978846
      %v1838 = vmul.f32 %v1806, 0.7978846
      %v1839 = vmul.f32 %v1807, 0.7978846
      %v1840 = vmul.f32 %v1808, 0.7978846
      %v1841 = vmul.f32 %v1809, 0.7978846
      %v1842 = vmul.f32 %v1810, 0.7978846
      %v1843 = vmul.f32 %v1811, 0.7978846
      %v1844 = vmul.f32 %v1812, 0.7978846
      %v1845 = vmul.f32 %v1813, 0.7978846
      %v1846 = vmul.f32 %v1814, 0.7978846
      %v1847 = vmul.f32 %v1815, 0.7978846
      %v1848 = vmul.f32 %v1816, 0.7978846
      %v1849 = vmul.f32 %v1817, 0.7978846
      %v1850 = vtanh.pop %v1818
      %v1851 = vtanh.pop %v1819
      %v1852 = vtanh.pop %v1820
      %v1853 = vtanh.pop %v1821
      %v1854 = vtanh.pop %v1822
      %v1855 = vtanh.pop %v1823
      %v1856 = vtanh.pop %v1824
      %v1857 = vtanh.pop %v1825
      %v1858 = vtanh.pop %v1826
      %v1859 = vtanh.pop %v1827
      %v1860 = vtanh.pop %v1828
      %v1861 = vtanh.pop %v1829
      %v1862 = vtanh.pop %v1830
      %v1863 = vtanh.pop %v1831
      %v1864 = vtanh.pop %v1832
      %v1865 = vtanh.pop %v1833
      %v1866 = vtanh.pop %v1834
      %v1867 = vtanh.pop %v1835
      %v1868 = vtanh.pop %v1836
      %v1869 = vtanh.pop %v1837
      %v1870 = vtanh.pop %v1838
      %v1871 = vtanh.pop %v1839
      %v1872 = vtanh.pop %v1840
      %v1873 = vtanh.pop %v1841
      %v1874 = vtanh.pop %v1842
      %v1875 = vtanh.pop %v1843
      %v1876 = vtanh.pop %v1844
      %v1877 = vtanh.pop %v1845
      %v1878 = vtanh.pop %v1846
      %v1879 = vtanh.pop %v1847
      %v1880 = vtanh.pop %v1848
      %v1881 = vtanh.pop %v1849
      %v1882 = vadd.f32 %v1850, 1.0
      %v1883 = vadd.f32 %v1851, 1.0
      %v1884 = vadd.f32 %v1852, 1.0
      %v1885 = vadd.f32 %v1853, 1.0
      %v1886 = vadd.f32 %v1854, 1.0
      %v1887 = vadd.f32 %v1855, 1.0
      %v1888 = vadd.f32 %v1856, 1.0
      %v1889 = vadd.f32 %v1857, 1.0
      %v1890 = vadd.f32 %v1858, 1.0
      %v1891 = vadd.f32 %v1859, 1.0
      %v1892 = vadd.f32 %v1860, 1.0
      %v1893 = vadd.f32 %v1861, 1.0
      %v1894 = vadd.f32 %v1862, 1.0
      %v1895 = vadd.f32 %v1863, 1.0
      %v1896 = vadd.f32 %v1864, 1.0
      %v1897 = vadd.f32 %v1865, 1.0
      %v1898 = vadd.f32 %v1866, 1.0
      %v1899 = vadd.f32 %v1867, 1.0
      %v1900 = vadd.f32 %v1868, 1.0
      %v1901 = vadd.f32 %v1869, 1.0
      %v1902 = vadd.f32 %v1870, 1.0
      %v1903 = vadd.f32 %v1871, 1.0
      %v1904 = vadd.f32 %v1872, 1.0
      %v1905 = vadd.f32 %v1873, 1.0
      %v1906 = vadd.f32 %v1874, 1.0
      %v1907 = vadd.f32 %v1875, 1.0
      %v1908 = vadd.f32 %v1876, 1.0
      %v1909 = vadd.f32 %v1877, 1.0
      %v1910 = vadd.f32 %v1878, 1.0
      %v1911 = vadd.f32 %v1879, 1.0
      %v1912 = vadd.f32 %v1880, 1.0
      %v1913 = vadd.f32 %v1881, 1.0
      %v1914 = vmul.f32 %v1658, %v1882
      %v1915 = vmul.f32 %v1659, %v1883
      %v1916 = vmul.f32 %v1660, %v1884
      %v1917 = vmul.f32 %v1661, %v1885
      %v1918 = vmul.f32 %v1662, %v1886
      %v1919 = vmul.f32 %v1663, %v1887
      %v1920 = vmul.f32 %v1664, %v1888
      %v1921 = vmul.f32 %v1665, %v1889
      %v1922 = vmul.f32 %v1666, %v1890
      %v1923 = vmul.f32 %v1667, %v1891
      %v1924 = vmul.f32 %v1668, %v1892
      %v1925 = vmul.f32 %v1669, %v1893
      %v1926 = vmul.f32 %v1670, %v1894
      %v1927 = vmul.f32 %v1671, %v1895
      %v1928 = vmul.f32 %v1672, %v1896
      %v1929 = vmul.f32 %v1673, %v1897
      %v1930 = vmul.f32 %v1674, %v1898
      %v1931 = vmul.f32 %v1675, %v1899
      %v1932 = vmul.f32 %v1676, %v1900
      %v1933 = vmul.f32 %v1677, %v1901
      %v1934 = vmul.f32 %v1678, %v1902
      %v1935 = vmul.f32 %v1679, %v1903
      %v1936 = vmul.f32 %v1680, %v1904
      %v1937 = vmul.f32 %v1681, %v1905
      %v1938 = vmul.f32 %v1682, %v1906
      %v1939 = vmul.f32 %v1683, %v1907
      %v1940 = vmul.f32 %v1684, %v1908
      %v1941 = vmul.f32 %v1685, %v1909
      %v1942 = vmul.f32 %v1686, %v1910
      %v1943 = vmul.f32 %v1687, %v1911
      %v1944 = vmul.f32 %v1688, %v1912
      %v1945 = vmul.f32 %v1689, %v1913
      %v1946 = vld [vmem:[%s5] sm:$0xff]
      %v1947 = vld [vmem:[%s5 + $0x8] sm:$0xff]
      %v1948 = vld [vmem:[%s5 + $0x10] sm:$0xff]
      %v1949 = vld [vmem:[%s5 + $0x18] sm:$0xff]
      %v1950 = vld [vmem:[%s5 + $0x20] sm:$0xff]
      %v1951 = vld [vmem:[%s5 + $0x28] sm:$0xff]
      %v1952 = vld [vmem:[%s5 + $0x30] sm:$0xff]
      %v1953 = vld [vmem:[%s5 + $0x38] sm:$0xff]
      %v1954 = vld [vmem:[%s5 + $0x40] sm:$0xff]
      %v1955 = vld [vmem:[%s5 + $0x48] sm:$0xff]
      %v1956 = vld [vmem:[%s5 + $0x50] sm:$0xff]
      %v1957 = vld [vmem:[%s5 + $0x58] sm:$0xff]
      %v1958 = vld [vmem:[%s5 + $0x60] sm:$0xff]
      %v1959 = vld [vmem:[%s5 + $0x68] sm:$0xff]
      %v1960 = vld [vmem:[%s5 + $0x70] sm:$0xff]
      %v1961 = vld [vmem:[%s5 + $0x78] sm:$0xff]
      %v1962 = vld [vmem:[%s6] sm:$0x1]
      %v1964 = vlaneseq
      %v1965 = vshrl.u32 %v1964, 7
      %v1966 = vsub.s32 0, %v1965
      %v1967 = vrot.slane %v1962, %v1966
      %1969 = vmatprep.subr.mxu0 0.0
      %1970 = vmatpush1.msra.mxu0 %v1946
      %1971 = vmatprep.subr.mxu0 0.0
      %1972 = vmatpush1.msra.mxu0 %v1947
      %1973 = vmatprep.subr.mxu0 0.0
      %1974 = vmatpush1.msra.mxu0 %v1948
      %1975 = vmatprep.subr.mxu0 0.0
      %1976 = vmatpush1.msra.mxu0 %v1949
      %1977 = vmatprep.subr.mxu0 0.0
      %1978 = vmatpush1.msra.mxu0 %v1950
      %1979 = vmatprep.subr.mxu0 0.0
      %1980 = vmatpush1.msra.mxu0 %v1951
      %1981 = vmatprep.subr.mxu0 0.0
      %1982 = vmatpush1.msra.mxu0 %v1952
      %1983 = vmatprep.subr.mxu0 0.0
      %1984 = vmatpush1.msra.mxu0 %v1953
      %1985 = vmatprep.subr.mxu0 0.0
      %1986 = vmatpush1.msra.mxu0 %v1954
      %1987 = vmatprep.subr.mxu0 0.0
      %1988 = vmatpush1.msra.mxu0 %v1955
      %1989 = vmatprep.subr.mxu0 0.0
      %1990 = vmatpush1.msra.mxu0 %v1956
      %1991 = vmatprep.subr.mxu0 0.0
      %1992 = vmatpush1.msra.mxu0 %v1957
      %1993 = vmatprep.subr.mxu0 0.0
      %1994 = vmatpush1.msra.mxu0 %v1958
      %1995 = vmatprep.subr.mxu0 0.0
      %1996 = vmatpush1.msra.mxu0 %v1959
      %1997 = vmatprep.subr.mxu0 0.0
      %1998 = vmatpush1.msra.mxu0 %v1960
      %1999 = vmatprep.subr.mxu0 0.0
      %2000 = vmatpush1.msra.mxu0 %v1961
      %2001 = vmatprep.subr.mxu0 0.0
      %2002 = vmatpush1.msra.mxu0 0.0
      %2003 = vmatprep.subr.mxu0 0.0
      %2004 = vmatpush1.msra.mxu0 0.0
      %2005 = vmatprep.subr.mxu0 0.0
      %2006 = vmatpush1.msra.mxu0 0.0
      %2007 = vmatprep.subr.mxu0 0.0
      %2008 = vmatpush1.msra.mxu0 0.0
      %2009 = vmatprep.subr.mxu0 0.0
      %2010 = vmatpush1.msra.mxu0 0.0
      %2011 = vmatprep.subr.mxu0 0.0
      %2012 = vmatpush1.msra.mxu0 0.0
      %2013 = vmatprep.subr.mxu0 0.0
      %2014 = vmatpush1.msra.mxu0 0.0
      %2015 = vmatprep.subr.mxu0 0.0
      %2016 = vmatpush1.msra.mxu0 0.0
      %2017 = vmatprep.subr.mxu0 0.0
      %2018 = vmatpush1.msra.mxu0 0.0
      %2019 = vmatprep.subr.mxu0 0.0
      %2020 = vmatpush1.msra.mxu0 0.0
      %2021 = vmatprep.subr.mxu0 0.0
      %2022 = vmatpush1.msra.mxu0 0.0
      %2023 = vmatprep.subr.mxu0 0.0
      %2024 = vmatpush1.msra.mxu0 0.0
      %2025 = vmatprep.subr.mxu0 0.0
      %2026 = vmatpush1.msra.mxu0 0.0
      %2027 = vmatprep.subr.mxu0 0.0
      %2028 = vmatpush1.msra.mxu0 0.0
      %2029 = vmatprep.subr.mxu0 0.0
      %2030 = vmatpush1.msra.mxu0 0.0
      %2031 = vmatprep.subr.mxu0 0.0
      %2032 = vmatpush1.msra.mxu0 0.0
      %2033 = vmatprep.mubr.f32.mxu0 0.0
      %2034 = vmatmul.mubr.f32.gmra.mrb[0].mxu0 %v1914
      %v2035 = vpop.f32.mrb[0].mxu0
      %v2036 = vadd.f32 %v1967, %v2035
      %v2037 = vpop.f32.mrb[0].mxu0
      %2038 = vmatprep.mubr.f32.mxu0 0.0
      %2039 = vmatmul.mubr.f32.gmra.mrb[0].mxu0 %v1915
      %v2040 = vpop.f32.mrb[0].mxu0
      %v2041 = vadd.f32 %v1967, %v2040
      %v2042 = vpop.f32.mrb[0].mxu0
      %2043 = vmatprep.mubr.f32.mxu0 0.0
      %2044 = vmatmul.mubr.f32.gmra.mrb[0].mxu0 %v1916
      %v2045 = vpop.f32.mrb[0].mxu0
      %v2046 = vadd.f32 %v1967, %v2045
      %v2047 = vpop.f32.mrb[0].mxu0
      %2048 = vmatprep.mubr.f32.mxu0 0.0
      %2049 = vmatmul.mubr.f32.gmra.mrb[0].mxu0 %v1917
      %v2050 = vpop.f32.mrb[0].mxu0
      %v2051 = vadd.f32 %v1967, %v2050
      %v2052 = vpop.f32.mrb[0].mxu0
      %2053 = vmatprep.mubr.f32.mxu0 0.0
      %2054 = vmatmul.mubr.f32.gmra.mrb[0].mxu0 %v1918
      %v2055 = vpop.f32.mrb[0].mxu0
      %v2056 = vadd.f32 %v1967, %v2055
      %v2057 = vpop.f32.mrb[0].mxu0
      %2058 = vmatprep.mubr.f32.mxu0 0.0
      %2059 = vmatmul.mubr.f32.gmra.mrb[0].mxu0 %v1919
      %v2060 = vpop.f32.mrb[0].mxu0
      %v2061 = vadd.f32 %v1967, %v2060
      %v2062 = vpop.f32.mrb[0].mxu0
      %2063 = vmatprep.mubr.f32.mxu0 0.0
      %2064 = vmatmul.mubr.f32.gmra.mrb[0].mxu0 %v1920
      %v2065 = vpop.f32.mrb[0].mxu0
      %v2066 = vadd.f32 %v1967, %v2065
      %v2067 = vpop.f32.mrb[0].mxu0
      %2068 = vmatprep.mubr.f32.mxu0 0.0
      %2069 = vmatmul.mubr.f32.gmra.mrb[0].mxu0 %v1921
      %v2070 = vpop.f32.mrb[0].mxu0
      %v2071 = vadd.f32 %v1967, %v2070
      %v2072 = vpop.f32.mrb[0].mxu0
      %2073 = vmatprep.mubr.f32.mxu0 0.0
      %2074 = vmatmul.mubr.f32.gmra.mrb[0].mxu0 %v1922
      %v2075 = vpop.f32.mrb[0].mxu0
      %v2076 = vadd.f32 %v1967, %v2075
      %v2077 = vpop.f32.mrb[0].mxu0
      %2078 = vmatprep.mubr.f32.mxu0 0.0
      %2079 = vmatmul.mubr.f32.gmra.mrb[0].mxu0 %v1923
      %v2080 = vpop.f32.mrb[0].mxu0
      %v2081 = vadd.f32 %v1967, %v2080
      %v2082 = vpop.f32.mrb[0].mxu0
      %2083 = vmatprep.mubr.f32.mxu0 0.0
      %2084 = vmatmul.mubr.f32.gmra.mrb[0].mxu0 %v1924
      %v2085 = vpop.f32.mrb[0].mxu0
      %v2086 = vadd.f32 %v1967, %v2085
      %v2087 = vpop.f32.mrb[0].mxu0
      %2088 = vmatprep.mubr.f32.mxu0 0.0
      %2089 = vmatmul.mubr.f32.gmra.mrb[0].mxu0 %v1925
      %v2090 = vpop.f32.mrb[0].mxu0
      %v2091 = vadd.f32 %v1967, %v2090
      %v2092 = vpop.f32.mrb[0].mxu0
      %2093 = vmatprep.mubr.f32.mxu0 0.0
      %2094 = vmatmul.mubr.f32.gmra.mrb[0].mxu0 %v1926
      %v2095 = vpop.f32.mrb[0].mxu0
      %v2096 = vadd.f32 %v1967, %v2095
      %v2097 = vpop.f32.mrb[0].mxu0
      %2098 = vmatprep.mubr.f32.mxu0 0.0
      %2099 = vmatmul.mubr.f32.gmra.mrb[0].mxu0 %v1927
      %v2100 = vpop.f32.mrb[0].mxu0
      %v2101 = vadd.f32 %v1967, %v2100
      %v2102 = vpop.f32.mrb[0].mxu0
      %2103 = vmatprep.mubr.f32.mxu0 0.0
      %2104 = vmatmul.mubr.f32.gmra.mrb[0].mxu0 %v1928
      %v2105 = vpop.f32.mrb[0].mxu0
      %v2106 = vadd.f32 %v1967, %v2105
      %v2107 = vpop.f32.mrb[0].mxu0
      %2108 = vmatprep.mubr.f32.mxu0 0.0
      %2109 = vmatmul.mubr.f32.gmra.mrb[0].mxu0 %v1929
      %v2110 = vpop.f32.mrb[0].mxu0
      %v2111 = vadd.f32 %v1967, %v2110
      %v2112 = vpop.f32.mrb[0].mxu0
      %2113 = vmatprep.mubr.f32.mxu0 0.0
      %2114 = vmatmul.mubr.f32.gmra.mrb[0].mxu0 %v1930
      %v2115 = vpop.f32.mrb[0].mxu0
      %v2116 = vadd.f32 %v1967, %v2115
      %v2117 = vpop.f32.mrb[0].mxu0
      %2118 = vmatprep.mubr.f32.mxu0 0.0
      %2119 = vmatmul.mubr.f32.gmra.mrb[0].mxu0 %v1931
      %v2120 = vpop.f32.mrb[0].mxu0
      %v2121 = vadd.f32 %v1967, %v2120
      %v2122 = vpop.f32.mrb[0].mxu0
      %2123 = vmatprep.mubr.f32.mxu0 0.0
      %2124 = vmatmul.mubr.f32.gmra.mrb[0].mxu0 %v1932
      %v2125 = vpop.f32.mrb[0].mxu0
      %v2126 = vadd.f32 %v1967, %v2125
      %v2127 = vpop.f32.mrb[0].mxu0
      %2128 = vmatprep.mubr.f32.mxu0 0.0
      %2129 = vmatmul.mubr.f32.gmra.mrb[0].mxu0 %v1933
      %v2130 = vpop.f32.mrb[0].mxu0
      %v2131 = vadd.f32 %v1967, %v2130
      %v2132 = vpop.f32.mrb[0].mxu0
      %2133 = vmatprep.mubr.f32.mxu0 0.0
      %2134 = vmatmul.mubr.f32.gmra.mrb[0].mxu0 %v1934
      %v2135 = vpop.f32.mrb[0].mxu0
      %v2136 = vadd.f32 %v1967, %v2135
      %v2137 = vpop.f32.mrb[0].mxu0
      %2138 = vmatprep.mubr.f32.mxu0 0.0
      %2139 = vmatmul.mubr.f32.gmra.mrb[0].mxu0 %v1935
      %v2140 = vpop.f32.mrb[0].mxu0
      %v2141 = vadd.f32 %v1967, %v2140
      %v2142 = vpop.f32.mrb[0].mxu0
      %2143 = vmatprep.mubr.f32.mxu0 0.0
      %2144 = vmatmul.mubr.f32.gmra.mrb[0].mxu0 %v1936
      %v2145 = vpop.f32.mrb[0].mxu0
      %v2146 = vadd.f32 %v1967, %v2145
      %v2147 = vpop.f32.mrb[0].mxu0
      %2148 = vmatprep.mubr.f32.mxu0 0.0
      %2149 = vmatmul.mubr.f32.gmra.mrb[0].mxu0 %v1937
      %v2150 = vpop.f32.mrb[0].mxu0
      %v2151 = vadd.f32 %v1967, %v2150
      %v2152 = vpop.f32.mrb[0].mxu0
      %2153 = vmatprep.mubr.f32.mxu0 0.0
      %2154 = vmatmul.mubr.f32.gmra.mrb[0].mxu0 %v1938
      %v2155 = vpop.f32.mrb[0].mxu0
      %v2156 = vadd.f32 %v1967, %v2155
      %v2157 = vpop.f32.mrb[0].mxu0
      %2158 = vmatprep.mubr.f32.mxu0 0.0
      %2159 = vmatmul.mubr.f32.gmra.mrb[0].mxu0 %v1939
      %v2160 = vpop.f32.mrb[0].mxu0
      %v2161 = vadd.f32 %v1967, %v2160
      %v2162 = vpop.f32.mrb[0].mxu0
      %2163 = vmatprep.mubr.f32.mxu0 0.0
      %2164 = vmatmul.mubr.f32.gmra.mrb[0].mxu0 %v1940
      %v2165 = vpop.f32.mrb[0].mxu0
      %v2166 = vadd.f32 %v1967, %v2165
      %v2167 = vpop.f32.mrb[0].mxu0
      %2168 = vmatprep.mubr.f32.mxu0 0.0
      %2169 = vmatmul.mubr.f32.gmra.mrb[0].mxu0 %v1941
      %v2170 = vpop.f32.mrb[0].mxu0
      %v2171 = vadd.f32 %v1967, %v2170
      %v2172 = vpop.f32.mrb[0].mxu0
      %2173 = vmatprep.mubr.f32.mxu0 0.0
      %2174 = vmatmul.mubr.f32.gmra.mrb[0].mxu0 %v1942
      %v2175 = vpop.f32.mrb[0].mxu0
      %v2176 = vadd.f32 %v1967, %v2175
      %v2177 = vpop.f32.mrb[0].mxu0
      %2178 = vmatprep.mubr.f32.mxu0 0.0
      %2179 = vmatmul.mubr.f32.gmra.mrb[0].mxu0 %v1943
      %v2180 = vpop.f32.mrb[0].mxu0
      %v2181 = vadd.f32 %v1967, %v2180
      %v2182 = vpop.f32.mrb[0].mxu0
      %2183 = vmatprep.mubr.f32.mxu0 0.0
      %2184 = vmatmul.mubr.f32.gmra.mrb[0].mxu0 %v1944
      %v2185 = vpop.f32.mrb[0].mxu0
      %v2186 = vadd.f32 %v1967, %v2185
      %v2187 = vpop.f32.mrb[0].mxu0
      %2188 = vmatprep.mubr.f32.mxu0 0.0
      %2189 = vmatmul.mubr.f32.gmra.mrb[0].mxu0 %v1945
      %v2190 = vpop.f32.mrb[0].mxu0
      %v2191 = vadd.f32 %v1967, %v2190
      %v2192 = vpop.f32.mrb[0].mxu0
      %2193 = vdwg.mxu0
      %2194 = vst.msk [vmem:[%s278] sm:$0xff] %vm322, %v2036
      %2195 = vst.msk [vmem:[%s278 + $0x8] sm:$0xff] %vm322, %v2041
      %2196 = vst.msk [vmem:[%s278 + $0x10] sm:$0xff] %vm322, %v2046
      %2197 = vst.msk [vmem:[%s278 + $0x18] sm:$0xff] %vm322, %v2051
      %2198 = vst.msk [vmem:[%s278 + $0x20] sm:$0xff] %vm322, %v2056
      %2199 = vst.msk [vmem:[%s278 + $0x28] sm:$0xff] %vm322, %v2061
      %2200 = vst.msk [vmem:[%s278 + $0x30] sm:$0xff] %vm322, %v2066
      %2201 = vst.msk [vmem:[%s278 + $0x38] sm:$0xff] %vm322, %v2071
      %2202 = vst.msk [vmem:[%s278 + $0x40] sm:$0xff] %vm322, %v2076
      %2203 = vst.msk [vmem:[%s278 + $0x48] sm:$0xff] %vm322, %v2081
      %2204 = vst.msk [vmem:[%s278 + $0x50] sm:$0xff] %vm322, %v2086
      %2205 = vst.msk [vmem:[%s278 + $0x58] sm:$0xff] %vm322, %v2091
      %2206 = vst.msk [vmem:[%s278 + $0x60] sm:$0xff] %vm322, %v2096
      %2207 = vst.msk [vmem:[%s278 + $0x68] sm:$0xff] %vm322, %v2101
      %2208 = vst.msk [vmem:[%s278 + $0x70] sm:$0xff] %vm322, %v2106
      %2209 = vst.msk [vmem:[%s278 + $0x78] sm:$0xff] %vm322, %v2111
      %2210 = vst.msk [vmem:[%s278 + $0x80] sm:$0xff] %vm322, %v2116
      %2211 = vst.msk [vmem:[%s278 + $0x88] sm:$0xff] %vm322, %v2121
      %2212 = vst.msk [vmem:[%s278 + $0x90] sm:$0xff] %vm322, %v2126
      %2213 = vst.msk [vmem:[%s278 + $0x98] sm:$0xff] %vm322, %v2131
      %2214 = vst.msk [vmem:[%s278 + $0xa0] sm:$0xff] %vm322, %v2136
      %2215 = vst.msk [vmem:[%s278 + $0xa8] sm:$0xff] %vm322, %v2141
      %2216 = vst.msk [vmem:[%s278 + $0xb0] sm:$0xff] %vm322, %v2146
      %2217 = vst.msk [vmem:[%s278 + $0xb8] sm:$0xff] %vm322, %v2151
      %2218 = vst.msk [vmem:[%s278 + $0xc0] sm:$0xff] %vm322, %v2156
      %2219 = vst.msk [vmem:[%s278 + $0xc8] sm:$0xff] %vm322, %v2161
      %2220 = vst.msk [vmem:[%s278 + $0xd0] sm:$0xff] %vm322, %v2166
      %2221 = vst.msk [vmem:[%s278 + $0xd8] sm:$0xff] %vm322, %v2171
      %2222 = vst.msk [vmem:[%s278 + $0xe0] sm:$0xff] %vm322, %v2176
      %2223 = vst.msk [vmem:[%s278 + $0xe8] sm:$0xff] %vm322, %v2181
      %2224 = vst.msk [vmem:[%s278 + $0xf0] sm:$0xff] %vm322, %v2186
      %2225 = vst.msk [vmem:[%s278 + $0xf8] sm:$0xff] %vm322, %v2191
      %p2226 = scmp.lt.s32.totalorder %s18, 1
      %s2227 = scalar_select %p2226, %s18, 1
      %s2228 = smul.addr %s2227, 32
      %s2229 = smul.addr %s2228, 8
      %s2230 = scalar_lea.vmem %s7, %s2229
      // Predicated region
      $region49: #{tpu_custom_call.1} parent=47 // pred_check
        %p2231 = pneg %p188
      $region50: #{tpu_custom_call.1} parent=47 // pred_check_branch
        %2233 = sbr.rel (%p2231) target = $region52
      $region51: #{tpu_custom_call.1} parent=47 // pred_region
        _
      $region52: #{tpu_custom_call.1} parent=47 // pred_fallthru
        _
    $region48: #{tpu_custom_call.1} parent=5 // pred_fallthru
      _
    %p2234 = scmp.le.s32.totalorder 2, %s13
    // Predicated region
    $region53: #{tpu_custom_call.1} parent=5 // pred_check
      %p2235 = pneg %p2234
    $region54: #{tpu_custom_call.1} parent=5 // pred_check_branch
      %2237 = sbr.rel (%p2235) target = $region56
    $region55: #{tpu_custom_call.1} parent=5 // pred_region
      %s2238 = ssub.s32 %s13, 2
      // Predicated region
      $region57: #{tpu_custom_call.1} parent=55 // pred_check
        %p2239 = pneg %p194
      $region58: #{tpu_custom_call.1} parent=55 // pred_check_branch
        %2241 = sbr.rel (%p2239) target = $region60
      $region59: #{tpu_custom_call.1} parent=55 // pred_region
        %p2242 = scmp.lt.s32.totalorder %s19, 1
        %s2243 = scalar_select %p2242, %s19, 1
        %s2244 = smul.addr %s2243, 32
        %s2245 = smul.addr %s2244, 8
        %s2246 = scalar_lea.vmem %s7, %s2245
      $region60: #{tpu_custom_call.1} parent=55 // pred_fallthru
        _
    $region56: #{tpu_custom_call.1} parent=5 // pred_fallthru
      _
  $region6: #{tpu_custom_call.1} parent=0 // loop_footer
    %s17 = sadd.s32 1, %s13
  $region7: #{tpu_custom_call.1} parent=0 // loop_footer_branch
    %12 = sbr.rel target = $region3
  $region8: #{tpu_custom_call.1} parent=0 // loop_exit
    _

</llo_original>
